<compile_context>
chip_gen: v5e
topology: v5e:2x2
jax: 0.10.0
libtpu: 0.0.40
codegen_flags: <defaults>
</compile_context>

<pallas_src>
from functools import partial

import jax
import jax.numpy as jnp
from jax.experimental import pallas as pl
from jax.experimental.pallas import tpu as pltpu


LANE = 128       # lane width == samples per time row
GROUP = 8        # lag blocks accumulated per VMEM flush of the accumulator
TR_DEFAULT = 64  # time rows per output tile -> matmul M dimension
# TODO(synk): on v6e/v7x a 256-wide variant (LANE=256, bf16 operands) would
# fill the full 256x256 MXU; kept at 128 here for v5e portability.


def _cdiv(a, b):
    return -(-a // b)


def _round_up(a, b):
    return _cdiv(a, b) * b


def _reverb_kernel(xprev_ref, xcurr_ref, toep_ref, out_ref, acc_ref, xcat_ref,
                   *, tr, dpb, shared, resident):
    """One (output tile j, lag chunk c) grid step.

    xprev_ref : [B, TR, L] f32    audio rows starting at (j - c - 1) * TR
    xcurr_ref : [B, TR, L] f32    audio rows starting at (j - c) * TR
    toep_ref  : resident : [DPBp, Bir, L, L] bf16  whole bank (fetched once)
                streaming: [TR,   Bir, L, L] bf16  slab for lag chunk c
    out_ref   : [B, TR, L] f32    output tile j (written on the last chunk)
    acc_ref   : [B, TR, L] f32    accumulator scratch (persists across c)
    xcat_ref  : [B, 2*TR, L] f32  staged halo (prev | curr)
    """
    c = pl.program_id(1)

    @pl.when(c == 0)
    def _init():
        # At c == 0 the "curr" halo block is exactly tile j's dry audio, so
        # seeding the accumulator with it implements `wet + audio` exactly
        # (the dry path never goes through bf16).
        acc_ref[...] = xcurr_ref[...]

    # Stage the halo once per step (both stores are sublane aligned since
    # TR % 8 == 0).  Replaces the per-step jnp.concatenate of the old kernel.
    xcat_ref[:, :tr, :] = xprev_ref[...]
    xcat_ref[:, tr:, :] = xcurr_ref[...]

    lag0 = c * tr                       # first lag block handled by this step

    for g in range(tr // GROUP):
        base = g * GROUP

        # Skip groups entirely past the real IR length (bank is zero padded so
        # this is purely a compute saving for short IRs).
        @pl.when(lag0 + base < dpb)
        def _group(base=base):
            part = None
            for u in range(GROUP):
                dp = base + u
                # Audio rows shifted by dp lag blocks (static start offset).
                # TODO(synk): if the sublane-shifted loads ever show up as
                # co-critical with the MXU, pre-shift 8 phase copies with
                # pltpu.roll so every slice start is 8-aligned.
                xs = xcat_ref[:, tr - dp:2 * tr - dp, :].astype(jnp.bfloat16)
                d_idx = lag0 + dp if resident else dp
                t = toep_ref[d_idx]                      # [Bir, L, L] bf16
                if shared:
                    # Shared IR: fold the batch into M -> [B*TR, L] @ [L, L].
                    y = jnp.dot(xs.reshape(-1, xs.shape[-1]), t[0],
                                preferred_element_type=jnp.float32)
                    y = y.reshape(acc_ref.shape)
                else:
                    y = jnp.einsum("bml,blp->bmp", xs, t,
                                   preferred_element_type=jnp.float32)
                part = y if part is None else part + y
            # Flush once per GROUP lag blocks: bounds vreg pressure without a
            # VMEM read-modify-write of the accumulator per matmul.
            acc_ref[...] += part

    @pl.when(c == pl.num_programs(1) - 1)
    def _finalize():
        out_ref[...] = acc_ref[...].astype(out_ref.dtype)


def reverb_forward(audio, ir, *, tr=None,
                   resident_vmem_bytes=24 * 1024 * 1024):
    """Pallas equivalent of Reverb.forward(audio, ir)."""
    audio = jnp.asarray(audio, jnp.float32)
    ir = jnp.asarray(ir, jnp.float32)
    if ir.ndim == 3:                     # [B, ir_size, 1] -> [B, ir_size]
        ir = ir[:, :, 0]
    if ir.ndim == 1:                     # [ir_size] -> [1, ir_size]
        ir = ir[None, :]

    B, N = audio.shape
    Bir, K = ir.shape
    assert Bir in (1, B), "ir batch must be 1 or match the audio batch"
    shared = Bir == 1                    # shared-IR fast path: no broadcast

    L = LANE
    nt = _cdiv(N, L)                     # audio time rows
    if tr is None:
        tr_ = min(TR_DEFAULT, _round_up(max(nt, 1), GROUP))
    else:
        tr_ = _round_up(max(int(tr), GROUP), GROUP)
    jt = _cdiv(nt, tr_)                  # output tiles (grid axis 0)
    ntp = jt * tr_                       # padded time rows

    dpb = (max(K, 1) - 1) // L + 1       # lag blocks covering taps 0..K-1
    cm = _cdiv(dpb, tr_)                 # lag chunks (grid axis 1)
    dpbp = cm * tr_                      # zero-padded lag blocks

    # Toeplitz bank [dpbp, Bir, L, L] bf16:  T[d, b, q, p] = ir[b, d*L + p - q]
    # masked to the valid tap range; first tap zeroed (== mask_dry_ir).
    # TODO(synk): this is an ~L-fold expansion of the IR built in plain XLA;
    # for very long IRs the precompute / HBM write can rival the kernel.
    ir_m = ir.at[:, 0].set(0.0)
    d_idx = jnp.arange(dpbp, dtype=jnp.int32)[:, None, None]
    q_idx = jnp.arange(L, dtype=jnp.int32)[None, :, None]
    p_idx = jnp.arange(L, dtype=jnp.int32)[None, None, :]
    k = d_idx * L + p_idx - q_idx                        # [dpbp, L, L]
    valid = (k >= 0) & (k < K)
    toep = jnp.where(valid[None], ir_m[:, jnp.clip(k, 0, K - 1)], 0.0)
    toep = jnp.moveaxis(toep, 0, 1).astype(jnp.bfloat16)  # [dpbp, Bir, L, L]

    # Audio rows with a causal left halo of dpbp zero rows + right padding.
    xpad = jnp.pad(audio, ((0, 0), (dpbp * L, ntp * L - N)))
    xrows = xpad.reshape(B, dpbp + ntp, L)

    # Resident vs streaming Toeplitz, budgeted against a v7x-safe 32 MiB
    # scoped-VMEM limit assuming double buffering of pipelined inputs.
    bank_bytes = dpbp * Bir * L * L * 2
    halo_bytes = B * tr_ * L * 4
    fixed_bytes = 9 * halo_bytes     # halo ins (x2 buf) + out (x2) + acc + xcat
    resident = 2 * bank_bytes + fixed_bytes <= resident_vmem_bytes
    if resident:
        # Constant index map -> fetched once per TensorCore, then reused.
        toep_spec = pl.BlockSpec((dpbp, Bir, L, L), lambda j, c: (0, 0, 0, 0))
    else:
        # Streaming fallback for very long IRs (~2*TR flop/byte with bf16).
        # TODO(synk): pipeline_mode=pl.Buffered(3) here if the slab DMA is
        # still exposed after the intensity fixes.
        toep_spec = pl.BlockSpec((tr_, Bir, L, L), lambda j, c: (c, 0, 0, 0))

    kernel = partial(_reverb_kernel, tr=tr_, dpb=dpb, shared=shared,
                     resident=resident)

    out_rows = pl.pallas_call(
        kernel,
        out_shape=jax.ShapeDtypeStruct((B, ntp, L), jnp.float32),
        grid_spec=pltpu.PrefetchScalarGridSpec(
            num_scalar_prefetch=0,
            grid=(jt, cm),
            in_specs=[
                # previous / current halo blocks of the (same) audio rows
                pl.BlockSpec((B, tr_, L), lambda j, c: (0, j - c - 1 + cm, 0)),
                pl.BlockSpec((B, tr_, L), lambda j, c: (0, j - c + cm, 0)),
                toep_spec,
            ],
            out_specs=pl.BlockSpec((B, tr_, L), lambda j, c: (0, j, 0)),
            scratch_shapes=[
                pltpu.VMEM((B, tr_, L), jnp.float32),       # accumulator
                pltpu.VMEM((B, 2 * tr_, L), jnp.float32),   # staged halo
            ],
        ),
        compiler_params=pltpu.CompilerParams(
            # "parallel" on j: on v7x megacore each TensorCore does a one-time
            # fetch of the resident Toeplitz bank into its own VMEM.
            dimension_semantics=("parallel", "arbitrary"),
            vmem_limit_bytes=32 * 1024 * 1024),
    )(xrows, xrows, toep)

    return out_rows.reshape(B, ntp * L)[:, :N]


def reverb_reference(audio, ir):
    """Pure-JAX reference: masked causal FIR conv + dry signal."""
    audio = jnp.asarray(audio, jnp.float32)
    ir = jnp.asarray(ir, jnp.float32)
    if ir.ndim == 3:
        ir = ir[:, :, 0]
    if ir.ndim == 1:
        ir = ir[None, :]
    if ir.shape[0] == 1 and audio.shape[0] > 1:
        ir = jnp.broadcast_to(ir, (audio.shape[0], ir.shape[1]))
    ir_masked = ir.at[:, 0].set(0.0)

    def one(a, h):
        return jnp.convolve(a, h)[: a.shape[0]]   # 'same' + delay_comp=0

    return jax.vmap(one)(audio, ir_masked) + audio


def _check(audio, ir, name, **kwargs):
    out = jax.block_until_ready(reverb_forward(audio, ir, **kwargs))
    ref = reverb_reference(audio, ir)
    assert out.shape == audio.shape and out.dtype == jnp.float32
    max_err = float(jnp.max(jnp.abs(out - ref)))
    scale = 1.0 + float(jnp.max(jnp.abs(ref)))
    # bf16 MXU operands (f32 accumulation): tolerance is deliberately looser
    # than the old f32/HIGHEST kernel (per review correctness note).
    assert max_err < 2e-2 * scale, f"{name}: mismatch max_err={max_err} scale={scale}"


if __name__ == "__main__":
    key = jax.random.PRNGKey(0)
    k1, k2, k3, k4, k5, k6 = jax.random.split(key, 6)

    # 1) Small, per-batch IR, single grid step.
    B, N, K = 2, 256, 64
    audio = jax.random.normal(k1, (B, N), dtype=jnp.float32)
    decay = jnp.exp(-jnp.arange(K, dtype=jnp.float32) / 16.0)
    ir = jax.random.normal(k2, (B, K), dtype=jnp.float32) * decay[None, :]
    _check(audio, ir, "small")

    # 2) Multi-tile / multi-chunk (grid=(3,2) at tr=8), [B, ir_size, 1] input
    #    layout, per-batch IR, resident Toeplitz bank.
    B2, N2, K2 = 2, 3000, 1200
    audio2 = jax.random.normal(k3, (B2, N2), dtype=jnp.float32)
    decay2 = jnp.exp(-jnp.arange(K2, dtype=jnp.float32) / 300.0)
    ir2 = (jax.random.normal(k4, (B2, K2), dtype=jnp.float32) * decay2[None, :])[..., None]
    _check(audio2, ir2, "multi-step", tr=8)

    # 3) Same shapes, streaming-Toeplitz fallback path forced.
    _check(audio2, ir2, "streaming", tr=8, resident_vmem_bytes=0)

    # 4) Shared IR (ir batch == 1): batch folded into the matmul M dimension.
    B3, N3, K3 = 3, 2000, 500
    audio3 = jax.random.normal(k5, (B3, N3), dtype=jnp.float32)
    decay3 = jnp.exp(-jnp.arange(K3, dtype=jnp.float32) / 128.0)
    ir3 = jax.random.normal(k6, (K3,), dtype=jnp.float32) * decay3
    _check(audio3, ir3, "shared-ir", tr=8)

    # 5) Default tiling (TR=64 -> matmul M = 64), shared IR, resident bank.
    B4, N4, K4 = 1, 16384, 2000
    audio4 = jax.random.normal(k1, (B4, N4), dtype=jnp.float32)
    decay4 = jnp.exp(-jnp.arange(K4, dtype=jnp.float32) / 500.0)
    ir4 = jax.random.normal(k2, (1, K4), dtype=jnp.float32) * decay4[None, :]
    _check(audio4, ir4, "default-tiling")

    print("KERNEL_OK")
</pallas_src>

<mosaic_0001>
module attributes {stable_mosaic.version = 11 : i64} {
  func.func @_reverb_kernel(%arg0: i32, %arg1: i32, %arg2: memref<2x8x128xf32, #tpu.memory_space<vmem>>, %arg3: memref<2x8x128xf32, #tpu.memory_space<vmem>>, %arg4: memref<8x2x128x128xbf16, #tpu.memory_space<vmem>>, %arg5: memref<2x8x128xf32, #tpu.memory_space<vmem>>, %arg6: memref<2x8x128xf32, #tpu.memory_space<vmem>>, %arg7: memref<2x16x128xf32, #tpu.memory_space<vmem>>) attributes {dimension_semantics = [#tpu.dimension_semantics<parallel>, #tpu.dimension_semantics<arbitrary>], iteration_bounds = array<i64: 1, 1>, scalar_prefetch = 0 : i64, scratch_operands = 2 : i64, tpu.core_type = #tpu.core_type<tc>, window_params = [{transform_indices = @transform_0, window_bounds = array<i64: 2, 8, 128>}, {transform_indices = @transform_1, window_bounds = array<i64: 2, 8, 128>}, {pipeline_mode = #tpu.pipeline_mode<synchronous>, transform_indices = @transform_2, window_bounds = array<i64: 8, 2, 128, 128>}, {transform_indices = @transform_3, window_bounds = array<i64: 2, 8, 128>}]} {
    %c0_i32 = arith.constant 0 : i32
    %0 = arith.cmpi eq, %arg1, %c0_i32 : i32
    %1 = arith.extui %0 : i1 to i32
    %c0_i32_0 = arith.constant 0 : i32
    %2 = arith.cmpi ne, %1, %c0_i32_0 : i32
    scf.if %2 {
      %c0_15 = arith.constant 0 : index
      %c0_16 = arith.constant 0 : index
      %c0_17 = arith.constant 0 : index
      %15 = vector.load %arg3[%c0_15, %c0_16, %c0_17] : memref<2x8x128xf32, #tpu.memory_space<vmem>>, vector<2x8x128xf32>
      %c0_18 = arith.constant 0 : index
      %c0_19 = arith.constant 0 : index
      %c0_20 = arith.constant 0 : index
      %16 = vector.load %arg6[%c0_18, %c0_19, %c0_20] : memref<2x8x128xf32, #tpu.memory_space<vmem>>, vector<2x8x128xf32>
      tpu.vector_store %arg6[%c0_18, %c0_19, %c0_20], %15 {strides = array<i32>} : memref<2x8x128xf32, #tpu.memory_space<vmem>>, vector<2x8x128xf32>,
    } else {
    }
    %c0 = arith.constant 0 : index
    %c0_1 = arith.constant 0 : index
    %c0_2 = arith.constant 0 : index
    %3 = vector.load %arg2[%c0, %c0_1, %c0_2] : memref<2x8x128xf32, #tpu.memory_space<vmem>>, vector<2x8x128xf32>
    %c0_3 = arith.constant 0 : index
    %c0_4 = arith.constant 0 : index
    %c0_5 = arith.constant 0 : index
    %4 = vector.load %arg7[%c0_3, %c0_4, %c0_5] : memref<2x16x128xf32, #tpu.memory_space<vmem>>, vector<2x8x128xf32>
    tpu.vector_store %arg7[%c0_3, %c0_4, %c0_5], %3 {strides = array<i32>} : memref<2x16x128xf32, #tpu.memory_space<vmem>>, vector<2x8x128xf32>,
    %c0_6 = arith.constant 0 : index
    %c0_7 = arith.constant 0 : index
    %c0_8 = arith.constant 0 : index
    %5 = vector.load %arg3[%c0_6, %c0_7, %c0_8] : memref<2x8x128xf32, #tpu.memory_space<vmem>>, vector<2x8x128xf32>
    %c0_9 = arith.constant 0 : index
    %c8 = arith.constant 8 : index
    %c0_10 = arith.constant 0 : index
    %6 = vector.load %arg7[%c0_9, %c8, %c0_10] : memref<2x16x128xf32, #tpu.memory_space<vmem>>, vector<2x8x128xf32>
    tpu.vector_store %arg7[%c0_9, %c8, %c0_10], %5 {strides = array<i32>} : memref<2x16x128xf32, #tpu.memory_space<vmem>>, vector<2x8x128xf32>,
    %c8_i32 = arith.constant 8 : i32
    %7 = arith.muli %arg1, %c8_i32 : i32
    %c0_i32_11 = arith.constant 0 : i32
    %8 = arith.addi %7, %c0_i32_11 : i32
    %c1_i32 = arith.constant 1 : i32
    %9 = arith.cmpi slt, %8, %c1_i32 : i32
    %10 = arith.extui %9 : i1 to i32
    %c0_i32_12 = arith.constant 0 : i32
    %11 = arith.cmpi ne, %10, %c0_i32_12 : i32
    scf.if %11 {
      %c0_15 = arith.constant 0 : index
      %c8_16 = arith.constant 8 : index
      %c0_17 = arith.constant 0 : index
      %15 = vector.load %arg7[%c0_15, %c8_16, %c0_17] : memref<2x16x128xf32, #tpu.memory_space<vmem>>, vector<2x8x128xf32>
      %16 = arith.truncf %15 : vector<2x8x128xf32> to vector<2x8x128xbf16>
      %c0_i32_18 = arith.constant 0 : i32
      %17 = arith.addi %7, %c0_i32_18 : i32
      %18 = arith.index_cast %17 : i32 to index
      %c0_19 = arith.constant 0 : index
      %c0_20 = arith.constant 0 : index
      %c0_21 = arith.constant 0 : index
      %19 = vector.load %arg4[%18, %c0_19, %c0_20, %c0_21] : memref<8x2x128x128xbf16, #tpu.memory_space<vmem>>, vector<1x2x128x128xbf16>
      %20 = vector.shape_cast %19 : vector<1x2x128x128xbf16> to vector<2x128x128xbf16>
      "tpu.trace_start"() <{level = 10 : i32, message = "bml,blp->bmp"}> : () -> ()
      %cst = arith.constant dense<0.000000e+00> : vector<2x8x128xf32>
      %21 = tpu.matmul %16, %20, %cst {dimension_numbers = #tpu.dot_dimension_numbers<[2], [1], [1], [2], [0, 0, 0, 1, 1, 2], [0], [0]>} : vector<2x8x128xbf16>, vector<2x128x128xbf16>, vector<2x8x128xf32> -> vector<2x8x128xf32>
      "tpu.trace_stop"() : () -> ()
      %c0_22 = arith.constant 0 : index
      %c7 = arith.constant 7 : index
      %c0_23 = arith.constant 0 : index
      %22 = vector.load %arg7[%c0_22, %c7, %c0_23] : memref<2x16x128xf32, #tpu.memory_space<vmem>>, vector<2x8x128xf32>
      %23 = arith.truncf %22 : vector<2x8x128xf32> to vector<2x8x128xbf16>
      %c1_i32_24 = arith.constant 1 : i32
      %24 = arith.addi %7, %c1_i32_24 : i32
      %25 = arith.index_cast %24 : i32 to index
      %c0_25 = arith.constant 0 : index
      %c0_26 = arith.constant 0 : index
      %c0_27 = arith.constant 0 : index
      %26 = vector.load %arg4[%25, %c0_25, %c0_26, %c0_27] : memref<8x2x128x128xbf16, #tpu.memory_space<vmem>>, vector<1x2x128x128xbf16>
      %27 = vector.shape_cast %26 : vector<1x2x128x128xbf16> to vector<2x128x128xbf16>
      "tpu.trace_start"() <{level = 10 : i32, message = "bml,blp->bmp"}> : () -> ()
      %cst_28 = arith.constant dense<0.000000e+00> : vector<2x8x128xf32>
      %28 = tpu.matmul %23, %27, %cst_28 {dimension_numbers = #tpu.dot_dimension_numbers<[2], [1], [1], [2], [0, 0, 0, 1, 1, 2], [0], [0]>} : vector<2x8x128xbf16>, vector<2x128x128xbf16>, vector<2x8x128xf32> -> vector<2x8x128xf32>
      "tpu.trace_stop"() : () -> ()
      %29 = arith.addf %21, %28 : vector<2x8x128xf32>
      %c0_29 = arith.constant 0 : index
      %c6 = arith.constant 6 : index
      %c0_30 = arith.constant 0 : index
      %30 = vector.load %arg7[%c0_29, %c6, %c0_30] : memref<2x16x128xf32, #tpu.memory_space<vmem>>, vector<2x8x128xf32>
      %31 = arith.truncf %30 : vector<2x8x128xf32> to vector<2x8x128xbf16>
      %c2_i32 = arith.constant 2 : i32
      %32 = arith.addi %7, %c2_i32 : i32
      %33 = arith.index_cast %32 : i32 to index
      %c0_31 = arith.constant 0 : index
      %c0_32 = arith.constant 0 : index
      %c0_33 = arith.constant 0 : index
      %34 = vector.load %arg4[%33, %c0_31, %c0_32, %c0_33] : memref<8x2x128x128xbf16, #tpu.memory_space<vmem>>, vector<1x2x128x128xbf16>
      %35 = vector.shape_cast %34 : vector<1x2x128x128xbf16> to vector<2x128x128xbf16>
      "tpu.trace_start"() <{level = 10 : i32, message = "bml,blp->bmp"}> : () -> ()
      %cst_34 = arith.constant dense<0.000000e+00> : vector<2x8x128xf32>
      %36 = tpu.matmul %31, %35, %cst_34 {dimension_numbers = #tpu.dot_dimension_numbers<[2], [1], [1], [2], [0, 0, 0, 1, 1, 2], [0], [0]>} : vector<2x8x128xbf16>, vector<2x128x128xbf16>, vector<2x8x128xf32> -> vector<2x8x128xf32>
      "tpu.trace_stop"() : () -> ()
      %37 = arith.addf %29, %36 : vector<2x8x128xf32>
      %c0_35 = arith.constant 0 : index
      %c5 = arith.constant 5 : index
      %c0_36 = arith.constant 0 : index
      %38 = vector.load %arg7[%c0_35, %c5, %c0_36] : memref<2x16x128xf32, #tpu.memory_space<vmem>>, vector<2x8x128xf32>
      %39 = arith.truncf %38 : vector<2x8x128xf32> to vector<2x8x128xbf16>
      %c3_i32 = arith.constant 3 : i32
      %40 = arith.addi %7, %c3_i32 : i32
      %41 = arith.index_cast %40 : i32 to index
      %c0_37 = arith.constant 0 : index
      %c0_38 = arith.constant 0 : index
      %c0_39 = arith.constant 0 : index
      %42 = vector.load %arg4[%41, %c0_37, %c0_38, %c0_39] : memref<8x2x128x128xbf16, #tpu.memory_space<vmem>>, vector<1x2x128x128xbf16>
      %43 = vector.shape_cast %42 : vector<1x2x128x128xbf16> to vector<2x128x128xbf16>
      "tpu.trace_start"() <{level = 10 : i32, message = "bml,blp->bmp"}> : () -> ()
      %cst_40 = arith.constant dense<0.000000e+00> : vector<2x8x128xf32>
      %44 = tpu.matmul %39, %43, %cst_40 {dimension_numbers = #tpu.dot_dimension_numbers<[2], [1], [1], [2], [0, 0, 0, 1, 1, 2], [0], [0]>} : vector<2x8x128xbf16>, vector<2x128x128xbf16>, vector<2x8x128xf32> -> vector<2x8x128xf32>
      "tpu.trace_stop"() : () -> ()
      %45 = arith.addf %37, %44 : vector<2x8x128xf32>
      %c0_41 = arith.constant 0 : index
      %c4 = arith.constant 4 : index
      %c0_42 = arith.constant 0 : index
      %46 = vector.load %arg7[%c0_41, %c4, %c0_42] : memref<2x16x128xf32, #tpu.memory_space<vmem>>, vector<2x8x128xf32>
      %47 = arith.truncf %46 : vector<2x8x128xf32> to vector<2x8x128xbf16>
      %c4_i32 = arith.constant 4 : i32
      %48 = arith.addi %7, %c4_i32 : i32
      %49 = arith.index_cast %48 : i32 to index
      %c0_43 = arith.constant 0 : index
      %c0_44 = arith.constant 0 : index
      %c0_45 = arith.constant 0 : index
      %50 = vector.load %arg4[%49, %c0_43, %c0_44, %c0_45] : memref<8x2x128x128xbf16, #tpu.memory_space<vmem>>, vector<1x2x128x128xbf16>
      %51 = vector.shape_cast %50 : vector<1x2x128x128xbf16> to vector<2x128x128xbf16>
      "tpu.trace_start"() <{level = 10 : i32, message = "bml,blp->bmp"}> : () -> ()
      %cst_46 = arith.constant dense<0.000000e+00> : vector<2x8x128xf32>
      %52 = tpu.matmul %47, %51, %cst_46 {dimension_numbers = #tpu.dot_dimension_numbers<[2], [1], [1], [2], [0, 0, 0, 1, 1, 2], [0], [0]>} : vector<2x8x128xbf16>, vector<2x128x128xbf16>, vector<2x8x128xf32> -> vector<2x8x128xf32>
      "tpu.trace_stop"() : () -> ()
      %53 = arith.addf %45, %52 : vector<2x8x128xf32>
      %c0_47 = arith.constant 0 : index
      %c3 = arith.constant 3 : index
      %c0_48 = arith.constant 0 : index
      %54 = vector.load %arg7[%c0_47, %c3, %c0_48] : memref<2x16x128xf32, #tpu.memory_space<vmem>>, vector<2x8x128xf32>
      %55 = arith.truncf %54 : vector<2x8x128xf32> to vector<2x8x128xbf16>
      %c5_i32 = arith.constant 5 : i32
      %56 = arith.addi %7, %c5_i32 : i32
      %57 = arith.index_cast %56 : i32 to index
      %c0_49 = arith.constant 0 : index
      %c0_50 = arith.constant 0 : index
      %c0_51 = arith.constant 0 : index
      %58 = vector.load %arg4[%57, %c0_49, %c0_50, %c0_51] : memref<8x2x128x128xbf16, #tpu.memory_space<vmem>>, vector<1x2x128x128xbf16>
      %59 = vector.shape_cast %58 : vector<1x2x128x128xbf16> to vector<2x128x128xbf16>
      "tpu.trace_start"() <{level = 10 : i32, message = "bml,blp->bmp"}> : () -> ()
      %cst_52 = arith.constant dense<0.000000e+00> : vector<2x8x128xf32>
      %60 = tpu.matmul %55, %59, %cst_52 {dimension_numbers = #tpu.dot_dimension_numbers<[2], [1], [1], [2], [0, 0, 0, 1, 1, 2], [0], [0]>} : vector<2x8x128xbf16>, vector<2x128x128xbf16>, vector<2x8x128xf32> -> vector<2x8x128xf32>
      "tpu.trace_stop"() : () -> ()
      %61 = arith.addf %53, %60 : vector<2x8x128xf32>
      %c0_53 = arith.constant 0 : index
      %c2 = arith.constant 2 : index
      %c0_54 = arith.constant 0 : index
      %62 = vector.load %arg7[%c0_53, %c2, %c0_54] : memref<2x16x128xf32, #tpu.memory_space<vmem>>, vector<2x8x128xf32>
      %63 = arith.truncf %62 : vector<2x8x128xf32> to vector<2x8x128xbf16>
      %c6_i32 = arith.constant 6 : i32
      %64 = arith.addi %7, %c6_i32 : i32
      %65 = arith.index_cast %64 : i32 to index
      %c0_55 = arith.constant 0 : index
      %c0_56 = arith.constant 0 : index
      %c0_57 = arith.constant 0 : index
      %66 = vector.load %arg4[%65, %c0_55, %c0_56, %c0_57] : memref<8x2x128x128xbf16, #tpu.memory_space<vmem>>, vector<1x2x128x128xbf16>
      %67 = vector.shape_cast %66 : vector<1x2x128x128xbf16> to vector<2x128x128xbf16>
      "tpu.trace_start"() <{level = 10 : i32, message = "bml,blp->bmp"}> : () -> ()
      %cst_58 = arith.constant dense<0.000000e+00> : vector<2x8x128xf32>
      %68 = tpu.matmul %63, %67, %cst_58 {dimension_numbers = #tpu.dot_dimension_numbers<[2], [1], [1], [2], [0, 0, 0, 1, 1, 2], [0], [0]>} : vector<2x8x128xbf16>, vector<2x128x128xbf16>, vector<2x8x128xf32> -> vector<2x8x128xf32>
      "tpu.trace_stop"() : () -> ()
      %69 = arith.addf %61, %68 : vector<2x8x128xf32>
      %c0_59 = arith.constant 0 : index
      %c1 = arith.constant 1 : index
      %c0_60 = arith.constant 0 : index
      %70 = vector.load %arg7[%c0_59, %c1, %c0_60] : memref<2x16x128xf32, #tpu.memory_space<vmem>>, vector<2x8x128xf32>
      %71 = arith.truncf %70 : vector<2x8x128xf32> to vector<2x8x128xbf16>
      %c7_i32 = arith.constant 7 : i32
      %72 = arith.addi %7, %c7_i32 : i32
      %73 = arith.index_cast %72 : i32 to index
      %c0_61 = arith.constant 0 : index
      %c0_62 = arith.constant 0 : index
      %c0_63 = arith.constant 0 : index
      %74 = vector.load %arg4[%73, %c0_61, %c0_62, %c0_63] : memref<8x2x128x128xbf16, #tpu.memory_space<vmem>>, vector<1x2x128x128xbf16>
      %75 = vector.shape_cast %74 : vector<1x2x128x128xbf16> to vector<2x128x128xbf16>
      "tpu.trace_start"() <{level = 10 : i32, message = "bml,blp->bmp"}> : () -> ()
      %cst_64 = arith.constant dense<0.000000e+00> : vector<2x8x128xf32>
      %76 = tpu.matmul %71, %75, %cst_64 {dimension_numbers = #tpu.dot_dimension_numbers<[2], [1], [1], [2], [0, 0, 0, 1, 1, 2], [0], [0]>} : vector<2x8x128xbf16>, vector<2x128x128xbf16>, vector<2x8x128xf32> -> vector<2x8x128xf32>
      "tpu.trace_stop"() : () -> ()
      %77 = arith.addf %69, %76 : vector<2x8x128xf32>
      %c0_65 = arith.constant 0 : index
      %c0_66 = arith.constant 0 : index
      %c0_67 = arith.constant 0 : index
      %78 = vector.load %arg6[%c0_65, %c0_66, %c0_67] : memref<2x8x128xf32, #tpu.memory_space<vmem>>, vector<2x8x128xf32>
      %79 = arith.addf %78, %77 : vector<2x8x128xf32>
      %c0_68 = arith.constant 0 : index
      %c0_69 = arith.constant 0 : index
      %c0_70 = arith.constant 0 : index
      %80 = vector.load %arg6[%c0_68, %c0_69, %c0_70] : memref<2x8x128xf32, #tpu.memory_space<vmem>>, vector<2x8x128xf32>
      tpu.vector_store %arg6[%c0_68, %c0_69, %c0_70], %79 {strides = array<i32>} : memref<2x8x128xf32, #tpu.memory_space<vmem>>, vector<2x8x128xf32>,
    } else {
    }
    %c0_i32_13 = arith.constant 0 : i32
    %12 = arith.cmpi eq, %arg1, %c0_i32_13 : i32
    %13 = arith.extui %12 : i1 to i32
    %c0_i32_14 = arith.constant 0 : i32
    %14 = arith.cmpi ne, %13, %c0_i32_14 : i32
    scf.if %14 {
      %c0_15 = arith.constant 0 : index
      %c0_16 = arith.constant 0 : index
      %c0_17 = arith.constant 0 : index
      %15 = vector.load %arg6[%c0_15, %c0_16, %c0_17] : memref<2x8x128xf32, #tpu.memory_space<vmem>>, vector<2x8x128xf32>
      %c0_18 = arith.constant 0 : index
      %c0_19 = arith.constant 0 : index
      %c0_20 = arith.constant 0 : index
      %16 = vector.load %arg5[%c0_18, %c0_19, %c0_20] : memref<2x8x128xf32, #tpu.memory_space<vmem>>, vector<2x8x128xf32>
      tpu.vector_store %arg5[%c0_18, %c0_19, %c0_20], %15 {strides = array<i32>} : memref<2x8x128xf32, #tpu.memory_space<vmem>>, vector<2x8x128xf32>,
    } else {
    }
    return
  }
  func.func @transform_0(%arg0: i32, %arg1: i32) -> (i32, i32, i32) {
    %0 = arith.subi %arg0, %arg1 : i32
    %c1_i32 = arith.constant 1 : i32
    %1 = arith.subi %0, %c1_i32 : i32
    %c1_i32_0 = arith.constant 1 : i32
    %2 = arith.addi %1, %c1_i32_0 : i32
    %c0_i32 = arith.constant 0 : i32
    %c0_i32_1 = arith.constant 0 : i32
    %c0_i32_2 = arith.constant 0 : i32
    return %c0_i32, %2, %c0_i32_1 : i32, i32, i32
  }
  func.func @transform_1(%arg0: i32, %arg1: i32) -> (i32, i32, i32) {
    %0 = arith.subi %arg0, %arg1 : i32
    %c1_i32 = arith.constant 1 : i32
    %1 = arith.addi %0, %c1_i32 : i32
    %c0_i32 = arith.constant 0 : i32
    %c0_i32_0 = arith.constant 0 : i32
    %c0_i32_1 = arith.constant 0 : i32
    return %c0_i32, %1, %c0_i32_0 : i32, i32, i32
  }
  func.func @transform_2(%arg0: i32, %arg1: i32) -> (i32, i32, i32, i32) {
    %c0_i32 = arith.constant 0 : i32
    %c0_i32_0 = arith.constant 0 : i32
    %c0_i32_1 = arith.constant 0 : i32
    %c0_i32_2 = arith.constant 0 : i32
    %c0_i32_3 = arith.constant 0 : i32
    return %c0_i32, %c0_i32_0, %c0_i32_1, %c0_i32_2 : i32, i32, i32, i32
  }
  func.func @transform_3(%arg0: i32, %arg1: i32) -> (i32, i32, i32) {
    %c0_i32 = arith.constant 0 : i32
    %c0_i32_0 = arith.constant 0 : i32
    %c0_i32_1 = arith.constant 0 : i32
    return %c0_i32, %arg0, %c0_i32_0 : i32, i32, i32
  }
}

</mosaic_0001>

<llo_original>
// kernel: tpu_custom_call.1
$region0: #{tpu_custom_call.1}
  #allocation0 [shape = 'u32[]', space=smem, size = 0x4, offset = 0x4, fixed_abs, tag = 'smem constant byte address 0x4 - core index']
  #allocation1 [shape = 'u32[72,128]{1,0:T(1,128)}', space=vmem, size = 0x9000, scoped, tag = 'internal scratch']
  #allocation2 [shape = 'f32[2,8,128]{2,1,0:T(8,128)}', space=vmem, size = 0x2000, scoped, tag = 'scratch operand']
  #allocation3 [shape = 'f32[2,16,128]{2,1,0:T(8,128)}', space=vmem, size = 0x4000, scoped, tag = 'scratch operand']
  %s0 = inlined_call_operand.hbm [shape: f32[2,16,128], index: 0, kind: input, shape index: {}]
  %s1 = inlined_call_operand.hbm [shape: f32[2,16,128], index: 1, kind: input, shape index: {}]
  %s2 = inlined_call_operand.hbm [shape: bf16[8,2,128,128], index: 2, kind: input, shape index: {}]
  %s3 = inlined_call_operand.hbm [shape: f32[2,8,128], index: 3, kind: output, shape index: {}]
  %s4 = sld [smem:[#allocation0]]
  $region46: #{tpu_custom_call.1} parent=0
    _
  %s6 = ssub.s32 1, %s4
  %s7 = scalar_select 0, %s6, %s4
  $region1: #{tpu_custom_call.1} parent=0
    #allocation4 [shape = 'u8[8192]{0}', space=vmem, size = 0x2000, scoped, tag = 'input window, operand 0, single buffered']
    #allocation5 [shape = 's32[1]{0}', space=sflag, size = 0x4, scoped, tag = 'scoped memory for tpu_custom_call.1']
    #allocation6 [shape = 's32[1]{0}', space=sflag, size = 0x4, scoped, tag = 'scoped memory for tpu_custom_call.1']
    #allocation7 [shape = 'u8[8192]{0}', space=vmem, size = 0x2000, scoped, tag = 'input window, operand 1, single buffered']
    #allocation8 [shape = 's32[1]{0}', space=sflag, size = 0x4, scoped, tag = 'scoped memory for tpu_custom_call.1']
    #allocation9 [shape = 'u8[524288]{0}', space=vmem, size = 0x80000, scoped, tag = 'input window, operand 2, single buffered']
    #allocation10 [shape = 'u8[8192]{0}', space=vmem, size = 0x2000, scoped, tag = 'output window, operand 0, single buffered']
    %8 = vsyncpa [#allocation5], 0
    %9 = vsyncpa [#allocation8], 0
    %10 = vsyncpa [#allocation6], 0
    // Predicated region
    $region2: #{tpu_custom_call.1} parent=1 // pred_check
      _
    $region3: #{tpu_custom_call.1} parent=1 // pred_check_branch
      %12 = sbr.rel (0) target = $region5
    $region4: #{tpu_custom_call.1} parent=1 // pred_region
      %s13 = ssub.s32 0, 0
      %15 = vsyncadd [#allocation5], 0
      %s16 = smul.addr %s13, 8
      %s17 = scalar_lea.hbm %s0, %s16
      %s18 = sshll.u32 %s17, 4
      %s19 = int_to_ptr.hbm [resolvable:$true] %s18
      %s20 = sshll.u32 [#allocation4], 4
      %s21 = int_to_ptr.vmem [resolvable:$true] %s20
      %26 = dma.hbm_to_vmem [thread:$0]  %s19, 256, %s21, [#allocation5], 256, 128, 8
    $region5: #{tpu_custom_call.1} parent=1 // pred_fallthru
      _
    // Predicated region
    $region6: #{tpu_custom_call.1} parent=1 // pred_check
      _
    $region7: #{tpu_custom_call.1} parent=1 // pred_check_branch
      %28 = sbr.rel (0) target = $region9
    $region8: #{tpu_custom_call.1} parent=1 // pred_region
      %s29 = ssub.s32 0, 0
      %s30 = sadd.s32 %s29, 1
      %32 = vsyncadd [#allocation8], 0
      %s33 = smul.addr %s30, 8
      %s34 = scalar_lea.hbm %s1, %s33
      %s35 = sshll.u32 %s34, 4
      %s36 = int_to_ptr.hbm [resolvable:$true] %s35
      %s37 = sshll.u32 [#allocation7], 4
      %s38 = int_to_ptr.vmem [resolvable:$true] %s37
      %43 = dma.hbm_to_vmem [thread:$0]  %s36, 256, %s38, [#allocation8], 256, 128, 8
    $region9: #{tpu_custom_call.1} parent=1 // pred_fallthru
      _
    // Predicated region
    $region10: #{tpu_custom_call.1} parent=1 // pred_check
      _
    $region11: #{tpu_custom_call.1} parent=1 // pred_check_branch
      %45 = sbr.rel (0) target = $region13
    $region12: #{tpu_custom_call.1} parent=1 // pred_region
      %47 = vsyncadd [#allocation8], 0
      %s48 = sshll.u32 %s2, 4
      %s49 = int_to_ptr.hbm [resolvable:$true] %s48
      %s50 = sshll.u32 [#allocation9], 4
      %s51 = int_to_ptr.vmem [resolvable:$true] %s50
      %56 = dma.hbm_to_vmem [thread:$0]  %s49, 16384, %s51, [#allocation8], 64, 64, 4
    $region13: #{tpu_custom_call.1} parent=1 // pred_fallthru
      _
    // Predicated region
    $region14: #{tpu_custom_call.1} parent=1 // pred_check
      _
    $region15: #{tpu_custom_call.1} parent=1 // pred_check_branch
      %58 = sbr.rel (0) target = $region17
    $region16: #{tpu_custom_call.1} parent=1 // pred_region
      %60 = dma.done [#allocation5], 256
    $region17: #{tpu_custom_call.1} parent=1 // pred_fallthru
      _
    // Predicated region
    $region18: #{tpu_custom_call.1} parent=1 // pred_check
      _
    $region19: #{tpu_custom_call.1} parent=1 // pred_check_branch
      %62 = sbr.rel (0) target = $region21
    $region20: #{tpu_custom_call.1} parent=1 // pred_region
      %64 = dma.done [#allocation8], 256
    $region21: #{tpu_custom_call.1} parent=1 // pred_fallthru
      _
    // Predicated region
    $region22: #{tpu_custom_call.1} parent=1 // pred_check
      _
    $region23: #{tpu_custom_call.1} parent=1 // pred_check_branch
      %66 = sbr.rel (0) target = $region25
    $region24: #{tpu_custom_call.1} parent=1 // pred_region
      %68 = dma.done [#allocation8], 16384
    $region25: #{tpu_custom_call.1} parent=1 // pred_fallthru
      _
    %s69 = ssub.s32 0, 0
    %s70 = ssub.s32 0, 0
    %s71 = sadd.s32 %s70, 1
    %p72 = scmp.eq.s32.totalorder 0, 0
    // Predicated region
    $region26: #{tpu_custom_call.1} parent=1 // pred_check
      %p73 = pneg %p72
    $region27: #{tpu_custom_call.1} parent=1 // pred_check_branch
      %75 = sbr.rel (%p73) target = $region29
    $region28: #{tpu_custom_call.1} parent=1 // pred_region
      %v76 = vld [vmem:[#allocation7] sm:$0xff]
      %v77 = vld [vmem:[#allocation7 + $0x8] sm:$0xff]
      %78 = vst [vmem:[#allocation2] sm:$0xff] %v76
      %79 = vst [vmem:[#allocation2 + $0x8] sm:$0xff] %v77
    $region29: #{tpu_custom_call.1} parent=1 // pred_fallthru
      _
    %v80 = vld [vmem:[#allocation4] sm:$0xff]
    %v81 = vld [vmem:[#allocation4 + $0x8] sm:$0xff]
    %82 = vst [vmem:[#allocation3] sm:$0xff] %v80
    %83 = vst [vmem:[#allocation3 + $0x10] sm:$0xff] %v81
    %v84 = vld [vmem:[#allocation7] sm:$0xff]
    %v85 = vld [vmem:[#allocation7 + $0x8] sm:$0xff]
    %86 = vst [vmem:[#allocation3 + $0x8] sm:$0xff] %v84
    %87 = vst [vmem:[#allocation3 + $0x18] sm:$0xff] %v85
    %s88 = smul.u32 0, 8
    %p89 = scmp.lt.s32.totalorder %s88, 1
    // Predicated region
    $region30: #{tpu_custom_call.1} parent=1 // pred_check
      %p90 = pneg %p89
    $region31: #{tpu_custom_call.1} parent=1 // pred_check_branch
      %92 = sbr.rel (%p90) target = $region33
    $region32: #{tpu_custom_call.1} parent=1 // pred_region
      %v93 = vld [vmem:[#allocation3 + $0x8] sm:$0xff]
      %v94 = vld [vmem:[#allocation3 + $0x18] sm:$0xff]
      %v95 = vpack.c.bf16 %v93, %v93
      %v96 = vpack.c.bf16 %v94, %v94
      %s97 = smul.u32 %s88, 32
      %s98 = smul.addr %s97, 4
      %s99 = scalar_lea.vmem [#allocation9], %s98
      %v100 = vld [vmem:[%s99] sm:$0xf]
      %v101 = vld [vmem:[%s99 + $0x4] sm:$0xf]
      %v102 = vld [vmem:[%s99 + $0x8] sm:$0xf]
      %v103 = vld [vmem:[%s99 + $0xc] sm:$0xf]
      %v104 = vld [vmem:[%s99 + $0x10] sm:$0xf]
      %v105 = vld [vmem:[%s99 + $0x14] sm:$0xf]
      %v106 = vld [vmem:[%s99 + $0x18] sm:$0xf]
      %v107 = vld [vmem:[%s99 + $0x1c] sm:$0xf]
      %v108 = vld [vmem:[%s99 + $0x20] sm:$0xf]
      %v109 = vld [vmem:[%s99 + $0x24] sm:$0xf]
      %v110 = vld [vmem:[%s99 + $0x28] sm:$0xf]
      %v111 = vld [vmem:[%s99 + $0x2c] sm:$0xf]
      %v112 = vld [vmem:[%s99 + $0x30] sm:$0xf]
      %v113 = vld [vmem:[%s99 + $0x34] sm:$0xf]
      %v114 = vld [vmem:[%s99 + $0x38] sm:$0xf]
      %v115 = vld [vmem:[%s99 + $0x3c] sm:$0xf]
      %v116 = vld [vmem:[%s99 + $0x40] sm:$0xf]
      %v117 = vld [vmem:[%s99 + $0x44] sm:$0xf]
      %v118 = vld [vmem:[%s99 + $0x48] sm:$0xf]
      %v119 = vld [vmem:[%s99 + $0x4c] sm:$0xf]
      %v120 = vld [vmem:[%s99 + $0x50] sm:$0xf]
      %v121 = vld [vmem:[%s99 + $0x54] sm:$0xf]
      %v122 = vld [vmem:[%s99 + $0x58] sm:$0xf]
      %v123 = vld [vmem:[%s99 + $0x5c] sm:$0xf]
      %v124 = vld [vmem:[%s99 + $0x60] sm:$0xf]
      %v125 = vld [vmem:[%s99 + $0x64] sm:$0xf]
      %v126 = vld [vmem:[%s99 + $0x68] sm:$0xf]
      %v127 = vld [vmem:[%s99 + $0x6c] sm:$0xf]
      %v128 = vld [vmem:[%s99 + $0x70] sm:$0xf]
      %v129 = vld [vmem:[%s99 + $0x74] sm:$0xf]
      %v130 = vld [vmem:[%s99 + $0x78] sm:$0xf]
      %v131 = vld [vmem:[%s99 + $0x7c] sm:$0xf]
      %v132 = vld [vmem:[#allocation3 + $0x7] sm:$0xff]
      %v133 = vld [vmem:[#allocation3 + $0x17] sm:$0xff]
      %v134 = vpack.c.bf16 %v132, %v132
      %v135 = vpack.c.bf16 %v133, %v133
      %s136 = sadd.s32 %s88, 1
      %s137 = smul.u32 %s136, 32
      %s138 = smul.addr %s137, 4
      %s139 = scalar_lea.vmem [#allocation9], %s138
      %v140 = vld [vmem:[%s139] sm:$0xf]
      %v141 = vld [vmem:[%s139 + $0x4] sm:$0xf]
      %v142 = vld [vmem:[%s139 + $0x8] sm:$0xf]
      %v143 = vld [vmem:[%s139 + $0xc] sm:$0xf]
      %v144 = vld [vmem:[%s139 + $0x10] sm:$0xf]
      %v145 = vld [vmem:[%s139 + $0x14] sm:$0xf]
      %v146 = vld [vmem:[%s139 + $0x18] sm:$0xf]
      %v147 = vld [vmem:[%s139 + $0x1c] sm:$0xf]
      %v148 = vld [vmem:[%s139 + $0x20] sm:$0xf]
      %v149 = vld [vmem:[%s139 + $0x24] sm:$0xf]
      %v150 = vld [vmem:[%s139 + $0x28] sm:$0xf]
      %v151 = vld [vmem:[%s139 + $0x2c] sm:$0xf]
      %v152 = vld [vmem:[%s139 + $0x30] sm:$0xf]
      %v153 = vld [vmem:[%s139 + $0x34] sm:$0xf]
      %v154 = vld [vmem:[%s139 + $0x38] sm:$0xf]
      %v155 = vld [vmem:[%s139 + $0x3c] sm:$0xf]
      %v156 = vld [vmem:[%s139 + $0x40] sm:$0xf]
      %v157 = vld [vmem:[%s139 + $0x44] sm:$0xf]
      %v158 = vld [vmem:[%s139 + $0x48] sm:$0xf]
      %v159 = vld [vmem:[%s139 + $0x4c] sm:$0xf]
      %v160 = vld [vmem:[%s139 + $0x50] sm:$0xf]
      %v161 = vld [vmem:[%s139 + $0x54] sm:$0xf]
      %v162 = vld [vmem:[%s139 + $0x58] sm:$0xf]
      %v163 = vld [vmem:[%s139 + $0x5c] sm:$0xf]
      %v164 = vld [vmem:[%s139 + $0x60] sm:$0xf]
      %v165 = vld [vmem:[%s139 + $0x64] sm:$0xf]
      %v166 = vld [vmem:[%s139 + $0x68] sm:$0xf]
      %v167 = vld [vmem:[%s139 + $0x6c] sm:$0xf]
      %v168 = vld [vmem:[%s139 + $0x70] sm:$0xf]
      %v169 = vld [vmem:[%s139 + $0x74] sm:$0xf]
      %v170 = vld [vmem:[%s139 + $0x78] sm:$0xf]
      %v171 = vld [vmem:[%s139 + $0x7c] sm:$0xf]
      %v188 = vunpack.c.l.b16 %v140
      %v189 = vunpack.c.l.b16 %v141
      %v190 = vunpack.c.l.b16 %v142
      %v191 = vunpack.c.l.b16 %v143
      %v192 = vunpack.c.l.b16 %v144
      %v193 = vunpack.c.l.b16 %v145
      %v194 = vunpack.c.l.b16 %v146
      %v195 = vunpack.c.l.b16 %v147
      %v196 = vunpack.c.l.b16 %v148
      %v197 = vunpack.c.l.b16 %v149
      %v198 = vunpack.c.l.b16 %v150
      %v199 = vunpack.c.l.b16 %v151
      %v200 = vunpack.c.l.b16 %v152
      %v201 = vunpack.c.l.b16 %v153
      %v202 = vunpack.c.l.b16 %v154
      %v203 = vunpack.c.l.b16 %v155
      %v204 = vpack.c.b16 %v189, %v188
      %v205 = vpack.c.b16 %v191, %v190
      %v206 = vpack.c.b16 %v193, %v192
      %v207 = vpack.c.b16 %v195, %v194
      %v208 = vpack.c.b16 %v197, %v196
      %v209 = vpack.c.b16 %v199, %v198
      %v210 = vpack.c.b16 %v201, %v200
      %v211 = vpack.c.b16 %v203, %v202
      %220 = vmatpush.bf16.msra.mxu0 %v211
      %221 = vmatpush.bf16.msra.mxu0 %v210
      %222 = vmatpush.bf16.msra.mxu0 %v209
      %223 = vmatpush.bf16.msra.mxu0 %v208
      %224 = vmatpush.bf16.msra.mxu0 %v207
      %225 = vmatpush.bf16.msra.mxu0 %v206
      %226 = vmatpush.bf16.msra.mxu0 %v205
      %227 = vmatpush.bf16.msra.mxu0 %v204
      %228 = vmatmul.bf16.gmra.mxu0 %v134
      %v229 = vpop.f32.mrf.mxu0
      %v230 = vadd.f32 0.0, %v229
      %v231 = vpop.f32.mrf.mxu0
      %232 = vdwg.mxu0
      %v249 = vunpack.c.l.b16 %v156
      %v250 = vunpack.c.l.b16 %v157
      %v251 = vunpack.c.l.b16 %v158
      %v252 = vunpack.c.l.b16 %v159
      %v253 = vunpack.c.l.b16 %v160
      %v254 = vunpack.c.l.b16 %v161
      %v255 = vunpack.c.l.b16 %v162
      %v256 = vunpack.c.l.b16 %v163
      %v257 = vunpack.c.l.b16 %v164
      %v258 = vunpack.c.l.b16 %v165
      %v259 = vunpack.c.l.b16 %v166
      %v260 = vunpack.c.l.b16 %v167
      %v261 = vunpack.c.l.b16 %v168
      %v262 = vunpack.c.l.b16 %v169
      %v263 = vunpack.c.l.b16 %v170
      %v264 = vunpack.c.l.b16 %v171
      %v265 = vpack.c.b16 %v250, %v249
      %v266 = vpack.c.b16 %v252, %v251
      %v267 = vpack.c.b16 %v254, %v253
      %v268 = vpack.c.b16 %v256, %v255
      %v269 = vpack.c.b16 %v258, %v257
      %v270 = vpack.c.b16 %v260, %v259
      %v271 = vpack.c.b16 %v262, %v261
      %v272 = vpack.c.b16 %v264, %v263
      %281 = vmatpush.bf16.msra.mxu0 %v272
      %282 = vmatpush.bf16.msra.mxu0 %v271
      %283 = vmatpush.bf16.msra.mxu0 %v270
      %284 = vmatpush.bf16.msra.mxu0 %v269
      %285 = vmatpush.bf16.msra.mxu0 %v268
      %286 = vmatpush.bf16.msra.mxu0 %v267
      %287 = vmatpush.bf16.msra.mxu0 %v266
      %288 = vmatpush.bf16.msra.mxu0 %v265
      %289 = vmatmul.bf16.gmra.mxu0 %v135
      %v290 = vpop.f32.mrf.mxu0
      %v291 = vadd.f32 0.0, %v290
      %v292 = vpop.f32.mrf.mxu0
      %293 = vdwg.mxu0
      %v310 = vunpack.c.l.b16 %v100
      %v311 = vunpack.c.l.b16 %v101
      %v312 = vunpack.c.l.b16 %v102
      %v313 = vunpack.c.l.b16 %v103
      %v314 = vunpack.c.l.b16 %v104
      %v315 = vunpack.c.l.b16 %v105
      %v316 = vunpack.c.l.b16 %v106
      %v317 = vunpack.c.l.b16 %v107
      %v318 = vunpack.c.l.b16 %v108
      %v319 = vunpack.c.l.b16 %v109
      %v320 = vunpack.c.l.b16 %v110
      %v321 = vunpack.c.l.b16 %v111
      %v322 = vunpack.c.l.b16 %v112
      %v323 = vunpack.c.l.b16 %v113
      %v324 = vunpack.c.l.b16 %v114
      %v325 = vunpack.c.l.b16 %v115
      %v326 = vpack.c.b16 %v311, %v310
      %v327 = vpack.c.b16 %v313, %v312
      %v328 = vpack.c.b16 %v315, %v314
      %v329 = vpack.c.b16 %v317, %v316
      %v330 = vpack.c.b16 %v319, %v318
      %v331 = vpack.c.b16 %v321, %v320
      %v332 = vpack.c.b16 %v323, %v322
      %v333 = vpack.c.b16 %v325, %v324
      %342 = vmatpush.bf16.msra.mxu0 %v333
      %343 = vmatpush.bf16.msra.mxu0 %v332
      %344 = vmatpush.bf16.msra.mxu0 %v331
      %345 = vmatpush.bf16.msra.mxu0 %v330
      %346 = vmatpush.bf16.msra.mxu0 %v329
      %347 = vmatpush.bf16.msra.mxu0 %v328
      %348 = vmatpush.bf16.msra.mxu0 %v327
      %349 = vmatpush.bf16.msra.mxu0 %v326
      %350 = vmatmul.bf16.gmra.mxu0 %v95
      %v351 = vpop.f32.mrf.mxu0
      %v352 = vadd.f32 %v230, %v351
      %v353 = vpop.f32.mrf.mxu0
      %354 = vdwg.mxu0
      %v371 = vunpack.c.l.b16 %v116
      %v372 = vunpack.c.l.b16 %v117
      %v373 = vunpack.c.l.b16 %v118
      %v374 = vunpack.c.l.b16 %v119
      %v375 = vunpack.c.l.b16 %v120
      %v376 = vunpack.c.l.b16 %v121
      %v377 = vunpack.c.l.b16 %v122
      %v378 = vunpack.c.l.b16 %v123
      %v379 = vunpack.c.l.b16 %v124
      %v380 = vunpack.c.l.b16 %v125
      %v381 = vunpack.c.l.b16 %v126
      %v382 = vunpack.c.l.b16 %v127
      %v383 = vunpack.c.l.b16 %v128
      %v384 = vunpack.c.l.b16 %v129
      %v385 = vunpack.c.l.b16 %v130
      %v386 = vunpack.c.l.b16 %v131
      %v387 = vpack.c.b16 %v372, %v371
      %v388 = vpack.c.b16 %v374, %v373
      %v389 = vpack.c.b16 %v376, %v375
      %v390 = vpack.c.b16 %v378, %v377
      %v391 = vpack.c.b16 %v380, %v379
      %v392 = vpack.c.b16 %v382, %v381
      %v393 = vpack.c.b16 %v384, %v383
      %v394 = vpack.c.b16 %v386, %v385
      %403 = vmatpush.bf16.msra.mxu0 %v394
      %404 = vmatpush.bf16.msra.mxu0 %v393
      %405 = vmatpush.bf16.msra.mxu0 %v392
      %406 = vmatpush.bf16.msra.mxu0 %v391
      %407 = vmatpush.bf16.msra.mxu0 %v390
      %408 = vmatpush.bf16.msra.mxu0 %v389
      %409 = vmatpush.bf16.msra.mxu0 %v388
      %410 = vmatpush.bf16.msra.mxu0 %v387
      %411 = vmatmul.bf16.gmra.mxu0 %v96
      %v412 = vpop.f32.mrf.mxu0
      %v413 = vadd.f32 %v291, %v412
      %v414 = vpop.f32.mrf.mxu0
      %415 = vdwg.mxu0
      %v416 = vld [vmem:[#allocation3 + $0x6] sm:$0xff]
      %v417 = vld [vmem:[#allocation3 + $0x16] sm:$0xff]
      %v418 = vpack.c.bf16 %v416, %v416
      %v419 = vpack.c.bf16 %v417, %v417
      %s420 = sadd.s32 %s88, 2
      %s421 = smul.u32 %s420, 32
      %s422 = smul.addr %s421, 4
      %s423 = scalar_lea.vmem [#allocation9], %s422
      %v424 = vld [vmem:[%s423] sm:$0xf]
      %v425 = vld [vmem:[%s423 + $0x4] sm:$0xf]
      %v426 = vld [vmem:[%s423 + $0x8] sm:$0xf]
      %v427 = vld [vmem:[%s423 + $0xc] sm:$0xf]
      %v428 = vld [vmem:[%s423 + $0x10] sm:$0xf]
      %v429 = vld [vmem:[%s423 + $0x14] sm:$0xf]
      %v430 = vld [vmem:[%s423 + $0x18] sm:$0xf]
      %v431 = vld [vmem:[%s423 + $0x1c] sm:$0xf]
      %v432 = vld [vmem:[%s423 + $0x20] sm:$0xf]
      %v433 = vld [vmem:[%s423 + $0x24] sm:$0xf]
      %v434 = vld [vmem:[%s423 + $0x28] sm:$0xf]
      %v435 = vld [vmem:[%s423 + $0x2c] sm:$0xf]
      %v436 = vld [vmem:[%s423 + $0x30] sm:$0xf]
      %v437 = vld [vmem:[%s423 + $0x34] sm:$0xf]
      %v438 = vld [vmem:[%s423 + $0x38] sm:$0xf]
      %v439 = vld [vmem:[%s423 + $0x3c] sm:$0xf]
      %v440 = vld [vmem:[%s423 + $0x40] sm:$0xf]
      %v441 = vld [vmem:[%s423 + $0x44] sm:$0xf]
      %v442 = vld [vmem:[%s423 + $0x48] sm:$0xf]
      %v443 = vld [vmem:[%s423 + $0x4c] sm:$0xf]
      %v444 = vld [vmem:[%s423 + $0x50] sm:$0xf]
      %v445 = vld [vmem:[%s423 + $0x54] sm:$0xf]
      %v446 = vld [vmem:[%s423 + $0x58] sm:$0xf]
      %v447 = vld [vmem:[%s423 + $0x5c] sm:$0xf]
      %v448 = vld [vmem:[%s423 + $0x60] sm:$0xf]
      %v449 = vld [vmem:[%s423 + $0x64] sm:$0xf]
      %v450 = vld [vmem:[%s423 + $0x68] sm:$0xf]
      %v451 = vld [vmem:[%s423 + $0x6c] sm:$0xf]
      %v452 = vld [vmem:[%s423 + $0x70] sm:$0xf]
      %v453 = vld [vmem:[%s423 + $0x74] sm:$0xf]
      %v454 = vld [vmem:[%s423 + $0x78] sm:$0xf]
      %v455 = vld [vmem:[%s423 + $0x7c] sm:$0xf]
      %v472 = vunpack.c.l.b16 %v424
      %v473 = vunpack.c.l.b16 %v425
      %v474 = vunpack.c.l.b16 %v426
      %v475 = vunpack.c.l.b16 %v427
      %v476 = vunpack.c.l.b16 %v428
      %v477 = vunpack.c.l.b16 %v429
      %v478 = vunpack.c.l.b16 %v430
      %v479 = vunpack.c.l.b16 %v431
      %v480 = vunpack.c.l.b16 %v432
      %v481 = vunpack.c.l.b16 %v433
      %v482 = vunpack.c.l.b16 %v434
      %v483 = vunpack.c.l.b16 %v435
      %v484 = vunpack.c.l.b16 %v436
      %v485 = vunpack.c.l.b16 %v437
      %v486 = vunpack.c.l.b16 %v438
      %v487 = vunpack.c.l.b16 %v439
      %v488 = vpack.c.b16 %v473, %v472
      %v489 = vpack.c.b16 %v475, %v474
      %v490 = vpack.c.b16 %v477, %v476
      %v491 = vpack.c.b16 %v479, %v478
      %v492 = vpack.c.b16 %v481, %v480
      %v493 = vpack.c.b16 %v483, %v482
      %v494 = vpack.c.b16 %v485, %v484
      %v495 = vpack.c.b16 %v487, %v486
      %504 = vmatpush.bf16.msra.mxu0 %v495
      %505 = vmatpush.bf16.msra.mxu0 %v494
      %506 = vmatpush.bf16.msra.mxu0 %v493
      %507 = vmatpush.bf16.msra.mxu0 %v492
      %508 = vmatpush.bf16.msra.mxu0 %v491
      %509 = vmatpush.bf16.msra.mxu0 %v490
      %510 = vmatpush.bf16.msra.mxu0 %v489
      %511 = vmatpush.bf16.msra.mxu0 %v488
      %512 = vmatmul.bf16.gmra.mxu0 %v418
      %v513 = vpop.f32.mrf.mxu0
      %v514 = vadd.f32 0.0, %v513
      %v515 = vpop.f32.mrf.mxu0
      %516 = vdwg.mxu0
      %v533 = vunpack.c.l.b16 %v440
      %v534 = vunpack.c.l.b16 %v441
      %v535 = vunpack.c.l.b16 %v442
      %v536 = vunpack.c.l.b16 %v443
      %v537 = vunpack.c.l.b16 %v444
      %v538 = vunpack.c.l.b16 %v445
      %v539 = vunpack.c.l.b16 %v446
      %v540 = vunpack.c.l.b16 %v447
      %v541 = vunpack.c.l.b16 %v448
      %v542 = vunpack.c.l.b16 %v449
      %v543 = vunpack.c.l.b16 %v450
      %v544 = vunpack.c.l.b16 %v451
      %v545 = vunpack.c.l.b16 %v452
      %v546 = vunpack.c.l.b16 %v453
      %v547 = vunpack.c.l.b16 %v454
      %v548 = vunpack.c.l.b16 %v455
      %v549 = vpack.c.b16 %v534, %v533
      %v550 = vpack.c.b16 %v536, %v535
      %v551 = vpack.c.b16 %v538, %v537
      %v552 = vpack.c.b16 %v540, %v539
      %v553 = vpack.c.b16 %v542, %v541
      %v554 = vpack.c.b16 %v544, %v543
      %v555 = vpack.c.b16 %v546, %v545
      %v556 = vpack.c.b16 %v548, %v547
      %565 = vmatpush.bf16.msra.mxu0 %v556
      %566 = vmatpush.bf16.msra.mxu0 %v555
      %567 = vmatpush.bf16.msra.mxu0 %v554
      %568 = vmatpush.bf16.msra.mxu0 %v553
      %569 = vmatpush.bf16.msra.mxu0 %v552
      %570 = vmatpush.bf16.msra.mxu0 %v551
      %571 = vmatpush.bf16.msra.mxu0 %v550
      %572 = vmatpush.bf16.msra.mxu0 %v549
      %573 = vmatmul.bf16.gmra.mxu0 %v419
      %v574 = vpop.f32.mrf.mxu0
      %v575 = vadd.f32 0.0, %v574
      %v576 = vpop.f32.mrf.mxu0
      %577 = vdwg.mxu0
      %v578 = vadd.f32 %v352, %v514
      %v579 = vadd.f32 %v413, %v575
      %v580 = vld [vmem:[#allocation3 + $0x5] sm:$0xff]
      %v581 = vld [vmem:[#allocation3 + $0x15] sm:$0xff]
      %v582 = vpack.c.bf16 %v580, %v580
      %v583 = vpack.c.bf16 %v581, %v581
      %s584 = sadd.s32 %s88, 3
      %s585 = smul.u32 %s584, 32
      %s586 = smul.addr %s585, 4
      %s587 = scalar_lea.vmem [#allocation9], %s586
      %v588 = vld [vmem:[%s587] sm:$0xf]
      %v589 = vld [vmem:[%s587 + $0x4] sm:$0xf]
      %v590 = vld [vmem:[%s587 + $0x8] sm:$0xf]
      %v591 = vld [vmem:[%s587 + $0xc] sm:$0xf]
      %v592 = vld [vmem:[%s587 + $0x10] sm:$0xf]
      %v593 = vld [vmem:[%s587 + $0x14] sm:$0xf]
      %v594 = vld [vmem:[%s587 + $0x18] sm:$0xf]
      %v595 = vld [vmem:[%s587 + $0x1c] sm:$0xf]
      %v596 = vld [vmem:[%s587 + $0x20] sm:$0xf]
      %v597 = vld [vmem:[%s587 + $0x24] sm:$0xf]
      %v598 = vld [vmem:[%s587 + $0x28] sm:$0xf]
      %v599 = vld [vmem:[%s587 + $0x2c] sm:$0xf]
      %v600 = vld [vmem:[%s587 + $0x30] sm:$0xf]
      %v601 = vld [vmem:[%s587 + $0x34] sm:$0xf]
      %v602 = vld [vmem:[%s587 + $0x38] sm:$0xf]
      %v603 = vld [vmem:[%s587 + $0x3c] sm:$0xf]
      %v604 = vld [vmem:[%s587 + $0x40] sm:$0xf]
      %v605 = vld [vmem:[%s587 + $0x44] sm:$0xf]
      %v606 = vld [vmem:[%s587 + $0x48] sm:$0xf]
      %v607 = vld [vmem:[%s587 + $0x4c] sm:$0xf]
      %v608 = vld [vmem:[%s587 + $0x50] sm:$0xf]
      %v609 = vld [vmem:[%s587 + $0x54] sm:$0xf]
      %v610 = vld [vmem:[%s587 + $0x58] sm:$0xf]
      %v611 = vld [vmem:[%s587 + $0x5c] sm:$0xf]
      %v612 = vld [vmem:[%s587 + $0x60] sm:$0xf]
      %v613 = vld [vmem:[%s587 + $0x64] sm:$0xf]
      %v614 = vld [vmem:[%s587 + $0x68] sm:$0xf]
      %v615 = vld [vmem:[%s587 + $0x6c] sm:$0xf]
      %v616 = vld [vmem:[%s587 + $0x70] sm:$0xf]
      %v617 = vld [vmem:[%s587 + $0x74] sm:$0xf]
      %v618 = vld [vmem:[%s587 + $0x78] sm:$0xf]
      %v619 = vld [vmem:[%s587 + $0x7c] sm:$0xf]
      %v636 = vunpack.c.l.b16 %v588
      %v637 = vunpack.c.l.b16 %v589
      %v638 = vunpack.c.l.b16 %v590
      %v639 = vunpack.c.l.b16 %v591
      %v640 = vunpack.c.l.b16 %v592
      %v641 = vunpack.c.l.b16 %v593
      %v642 = vunpack.c.l.b16 %v594
      %v643 = vunpack.c.l.b16 %v595
      %v644 = vunpack.c.l.b16 %v596
      %v645 = vunpack.c.l.b16 %v597
      %v646 = vunpack.c.l.b16 %v598
      %v647 = vunpack.c.l.b16 %v599
      %v648 = vunpack.c.l.b16 %v600
      %v649 = vunpack.c.l.b16 %v601
      %v650 = vunpack.c.l.b16 %v602
      %v651 = vunpack.c.l.b16 %v603
      %v652 = vpack.c.b16 %v637, %v636
      %v653 = vpack.c.b16 %v639, %v638
      %v654 = vpack.c.b16 %v641, %v640
      %v655 = vpack.c.b16 %v643, %v642
      %v656 = vpack.c.b16 %v645, %v644
      %v657 = vpack.c.b16 %v647, %v646
      %v658 = vpack.c.b16 %v649, %v648
      %v659 = vpack.c.b16 %v651, %v650
      %668 = vmatpush.bf16.msra.mxu0 %v659
      %669 = vmatpush.bf16.msra.mxu0 %v658
      %670 = vmatpush.bf16.msra.mxu0 %v657
      %671 = vmatpush.bf16.msra.mxu0 %v656
      %672 = vmatpush.bf16.msra.mxu0 %v655
      %673 = vmatpush.bf16.msra.mxu0 %v654
      %674 = vmatpush.bf16.msra.mxu0 %v653
      %675 = vmatpush.bf16.msra.mxu0 %v652
      %676 = vmatmul.bf16.gmra.mxu0 %v582
      %v677 = vpop.f32.mrf.mxu0
      %v678 = vadd.f32 0.0, %v677
      %v679 = vpop.f32.mrf.mxu0
      %680 = vdwg.mxu0
      %v697 = vunpack.c.l.b16 %v604
      %v698 = vunpack.c.l.b16 %v605
      %v699 = vunpack.c.l.b16 %v606
      %v700 = vunpack.c.l.b16 %v607
      %v701 = vunpack.c.l.b16 %v608
      %v702 = vunpack.c.l.b16 %v609
      %v703 = vunpack.c.l.b16 %v610
      %v704 = vunpack.c.l.b16 %v611
      %v705 = vunpack.c.l.b16 %v612
      %v706 = vunpack.c.l.b16 %v613
      %v707 = vunpack.c.l.b16 %v614
      %v708 = vunpack.c.l.b16 %v615
      %v709 = vunpack.c.l.b16 %v616
      %v710 = vunpack.c.l.b16 %v617
      %v711 = vunpack.c.l.b16 %v618
      %v712 = vunpack.c.l.b16 %v619
      %v713 = vpack.c.b16 %v698, %v697
      %v714 = vpack.c.b16 %v700, %v699
      %v715 = vpack.c.b16 %v702, %v701
      %v716 = vpack.c.b16 %v704, %v703
      %v717 = vpack.c.b16 %v706, %v705
      %v718 = vpack.c.b16 %v708, %v707
      %v719 = vpack.c.b16 %v710, %v709
      %v720 = vpack.c.b16 %v712, %v711
      %729 = vmatpush.bf16.msra.mxu0 %v720
      %730 = vmatpush.bf16.msra.mxu0 %v719
      %731 = vmatpush.bf16.msra.mxu0 %v718
      %732 = vmatpush.bf16.msra.mxu0 %v717
      %733 = vmatpush.bf16.msra.mxu0 %v716
      %734 = vmatpush.bf16.msra.mxu0 %v715
      %735 = vmatpush.bf16.msra.mxu0 %v714
      %736 = vmatpush.bf16.msra.mxu0 %v713
      %737 = vmatmul.bf16.gmra.mxu0 %v583
      %v738 = vpop.f32.mrf.mxu0
      %v739 = vadd.f32 0.0, %v738
      %v740 = vpop.f32.mrf.mxu0
      %741 = vdwg.mxu0
      %v742 = vadd.f32 %v578, %v678
      %v743 = vadd.f32 %v579, %v739
      %v744 = vld [vmem:[#allocation3 + $0x4] sm:$0xff]
      %v745 = vld [vmem:[#allocation3 + $0x14] sm:$0xff]
      %v746 = vpack.c.bf16 %v744, %v744
      %v747 = vpack.c.bf16 %v745, %v745
      %s748 = sadd.s32 %s88, 4
      %s749 = smul.u32 %s748, 32
      %s750 = smul.addr %s749, 4
      %s751 = scalar_lea.vmem [#allocation9], %s750
      %v752 = vld [vmem:[%s751] sm:$0xf]
      %v753 = vld [vmem:[%s751 + $0x4] sm:$0xf]
      %v754 = vld [vmem:[%s751 + $0x8] sm:$0xf]
      %v755 = vld [vmem:[%s751 + $0xc] sm:$0xf]
      %v756 = vld [vmem:[%s751 + $0x10] sm:$0xf]
      %v757 = vld [vmem:[%s751 + $0x14] sm:$0xf]
      %v758 = vld [vmem:[%s751 + $0x18] sm:$0xf]
      %v759 = vld [vmem:[%s751 + $0x1c] sm:$0xf]
      %v760 = vld [vmem:[%s751 + $0x20] sm:$0xf]
      %v761 = vld [vmem:[%s751 + $0x24] sm:$0xf]
      %v762 = vld [vmem:[%s751 + $0x28] sm:$0xf]
      %v763 = vld [vmem:[%s751 + $0x2c] sm:$0xf]
      %v764 = vld [vmem:[%s751 + $0x30] sm:$0xf]
      %v765 = vld [vmem:[%s751 + $0x34] sm:$0xf]
      %v766 = vld [vmem:[%s751 + $0x38] sm:$0xf]
      %v767 = vld [vmem:[%s751 + $0x3c] sm:$0xf]
      %v768 = vld [vmem:[%s751 + $0x40] sm:$0xf]
      %v769 = vld [vmem:[%s751 + $0x44] sm:$0xf]
      %v770 = vld [vmem:[%s751 + $0x48] sm:$0xf]
      %v771 = vld [vmem:[%s751 + $0x4c] sm:$0xf]
      %v772 = vld [vmem:[%s751 + $0x50] sm:$0xf]
      %v773 = vld [vmem:[%s751 + $0x54] sm:$0xf]
      %v774 = vld [vmem:[%s751 + $0x58] sm:$0xf]
      %v775 = vld [vmem:[%s751 + $0x5c] sm:$0xf]
      %v776 = vld [vmem:[%s751 + $0x60] sm:$0xf]
      %v777 = vld [vmem:[%s751 + $0x64] sm:$0xf]
      %v778 = vld [vmem:[%s751 + $0x68] sm:$0xf]
      %v779 = vld [vmem:[%s751 + $0x6c] sm:$0xf]
      %v780 = vld [vmem:[%s751 + $0x70] sm:$0xf]
      %v781 = vld [vmem:[%s751 + $0x74] sm:$0xf]
      %v782 = vld [vmem:[%s751 + $0x78] sm:$0xf]
      %v783 = vld [vmem:[%s751 + $0x7c] sm:$0xf]
      %v800 = vunpack.c.l.b16 %v752
      %v801 = vunpack.c.l.b16 %v753
      %v802 = vunpack.c.l.b16 %v754
      %v803 = vunpack.c.l.b16 %v755
      %v804 = vunpack.c.l.b16 %v756
      %v805 = vunpack.c.l.b16 %v757
      %v806 = vunpack.c.l.b16 %v758
      %v807 = vunpack.c.l.b16 %v759
      %v808 = vunpack.c.l.b16 %v760
      %v809 = vunpack.c.l.b16 %v761
      %v810 = vunpack.c.l.b16 %v762
      %v811 = vunpack.c.l.b16 %v763
      %v812 = vunpack.c.l.b16 %v764
      %v813 = vunpack.c.l.b16 %v765
      %v814 = vunpack.c.l.b16 %v766
      %v815 = vunpack.c.l.b16 %v767
      %v816 = vpack.c.b16 %v801, %v800
      %v817 = vpack.c.b16 %v803, %v802
      %v818 = vpack.c.b16 %v805, %v804
      %v819 = vpack.c.b16 %v807, %v806
      %v820 = vpack.c.b16 %v809, %v808
      %v821 = vpack.c.b16 %v811, %v810
      %v822 = vpack.c.b16 %v813, %v812
      %v823 = vpack.c.b16 %v815, %v814
      %832 = vmatpush.bf16.msra.mxu0 %v823
      %833 = vmatpush.bf16.msra.mxu0 %v822
      %834 = vmatpush.bf16.msra.mxu0 %v821
      %835 = vmatpush.bf16.msra.mxu0 %v820
      %836 = vmatpush.bf16.msra.mxu0 %v819
      %837 = vmatpush.bf16.msra.mxu0 %v818
      %838 = vmatpush.bf16.msra.mxu0 %v817
      %839 = vmatpush.bf16.msra.mxu0 %v816
      %840 = vmatmul.bf16.gmra.mxu0 %v746
      %v841 = vpop.f32.mrf.mxu0
      %v842 = vadd.f32 0.0, %v841
      %v843 = vpop.f32.mrf.mxu0
      %844 = vdwg.mxu0
      %v861 = vunpack.c.l.b16 %v768
      %v862 = vunpack.c.l.b16 %v769
      %v863 = vunpack.c.l.b16 %v770
      %v864 = vunpack.c.l.b16 %v771
      %v865 = vunpack.c.l.b16 %v772
      %v866 = vunpack.c.l.b16 %v773
      %v867 = vunpack.c.l.b16 %v774
      %v868 = vunpack.c.l.b16 %v775
      %v869 = vunpack.c.l.b16 %v776
      %v870 = vunpack.c.l.b16 %v777
      %v871 = vunpack.c.l.b16 %v778
      %v872 = vunpack.c.l.b16 %v779
      %v873 = vunpack.c.l.b16 %v780
      %v874 = vunpack.c.l.b16 %v781
      %v875 = vunpack.c.l.b16 %v782
      %v876 = vunpack.c.l.b16 %v783
      %v877 = vpack.c.b16 %v862, %v861
      %v878 = vpack.c.b16 %v864, %v863
      %v879 = vpack.c.b16 %v866, %v865
      %v880 = vpack.c.b16 %v868, %v867
      %v881 = vpack.c.b16 %v870, %v869
      %v882 = vpack.c.b16 %v872, %v871
      %v883 = vpack.c.b16 %v874, %v873
      %v884 = vpack.c.b16 %v876, %v875
      %893 = vmatpush.bf16.msra.mxu0 %v884
      %894 = vmatpush.bf16.msra.mxu0 %v883
      %895 = vmatpush.bf16.msra.mxu0 %v882
      %896 = vmatpush.bf16.msra.mxu0 %v881
      %897 = vmatpush.bf16.msra.mxu0 %v880
      %898 = vmatpush.bf16.msra.mxu0 %v879
      %899 = vmatpush.bf16.msra.mxu0 %v878
      %900 = vmatpush.bf16.msra.mxu0 %v877
      %901 = vmatmul.bf16.gmra.mxu0 %v747
      %v902 = vpop.f32.mrf.mxu0
      %v903 = vadd.f32 0.0, %v902
      %v904 = vpop.f32.mrf.mxu0
      %905 = vdwg.mxu0
      %v906 = vadd.f32 %v742, %v842
      %v907 = vadd.f32 %v743, %v903
      %v908 = vld [vmem:[#allocation3 + $0x3] sm:$0xff]
      %v909 = vld [vmem:[#allocation3 + $0x13] sm:$0xff]
      %v910 = vpack.c.bf16 %v908, %v908
      %v911 = vpack.c.bf16 %v909, %v909
      %s912 = sadd.s32 %s88, 5
      %s913 = smul.u32 %s912, 32
      %s914 = smul.addr %s913, 4
      %s915 = scalar_lea.vmem [#allocation9], %s914
      %v916 = vld [vmem:[%s915] sm:$0xf]
      %v917 = vld [vmem:[%s915 + $0x4] sm:$0xf]
      %v918 = vld [vmem:[%s915 + $0x8] sm:$0xf]
      %v919 = vld [vmem:[%s915 + $0xc] sm:$0xf]
      %v920 = vld [vmem:[%s915 + $0x10] sm:$0xf]
      %v921 = vld [vmem:[%s915 + $0x14] sm:$0xf]
      %v922 = vld [vmem:[%s915 + $0x18] sm:$0xf]
      %v923 = vld [vmem:[%s915 + $0x1c] sm:$0xf]
      %v924 = vld [vmem:[%s915 + $0x20] sm:$0xf]
      %v925 = vld [vmem:[%s915 + $0x24] sm:$0xf]
      %v926 = vld [vmem:[%s915 + $0x28] sm:$0xf]
      %v927 = vld [vmem:[%s915 + $0x2c] sm:$0xf]
      %v928 = vld [vmem:[%s915 + $0x30] sm:$0xf]
      %v929 = vld [vmem:[%s915 + $0x34] sm:$0xf]
      %v930 = vld [vmem:[%s915 + $0x38] sm:$0xf]
      %v931 = vld [vmem:[%s915 + $0x3c] sm:$0xf]
      %v932 = vld [vmem:[%s915 + $0x40] sm:$0xf]
      %v933 = vld [vmem:[%s915 + $0x44] sm:$0xf]
      %v934 = vld [vmem:[%s915 + $0x48] sm:$0xf]
      %v935 = vld [vmem:[%s915 + $0x4c] sm:$0xf]
      %v936 = vld [vmem:[%s915 + $0x50] sm:$0xf]
      %v937 = vld [vmem:[%s915 + $0x54] sm:$0xf]
      %v938 = vld [vmem:[%s915 + $0x58] sm:$0xf]
      %v939 = vld [vmem:[%s915 + $0x5c] sm:$0xf]
      %v940 = vld [vmem:[%s915 + $0x60] sm:$0xf]
      %v941 = vld [vmem:[%s915 + $0x64] sm:$0xf]
      %v942 = vld [vmem:[%s915 + $0x68] sm:$0xf]
      %v943 = vld [vmem:[%s915 + $0x6c] sm:$0xf]
      %v944 = vld [vmem:[%s915 + $0x70] sm:$0xf]
      %v945 = vld [vmem:[%s915 + $0x74] sm:$0xf]
      %v946 = vld [vmem:[%s915 + $0x78] sm:$0xf]
      %v947 = vld [vmem:[%s915 + $0x7c] sm:$0xf]
      %v964 = vunpack.c.l.b16 %v916
      %v965 = vunpack.c.l.b16 %v917
      %v966 = vunpack.c.l.b16 %v918
      %v967 = vunpack.c.l.b16 %v919
      %v968 = vunpack.c.l.b16 %v920
      %v969 = vunpack.c.l.b16 %v921
      %v970 = vunpack.c.l.b16 %v922
      %v971 = vunpack.c.l.b16 %v923
      %v972 = vunpack.c.l.b16 %v924
      %v973 = vunpack.c.l.b16 %v925
      %v974 = vunpack.c.l.b16 %v926
      %v975 = vunpack.c.l.b16 %v927
      %v976 = vunpack.c.l.b16 %v928
      %v977 = vunpack.c.l.b16 %v929
      %v978 = vunpack.c.l.b16 %v930
      %v979 = vunpack.c.l.b16 %v931
      %v980 = vpack.c.b16 %v965, %v964
      %v981 = vpack.c.b16 %v967, %v966
      %v982 = vpack.c.b16 %v969, %v968
      %v983 = vpack.c.b16 %v971, %v970
      %v984 = vpack.c.b16 %v973, %v972
      %v985 = vpack.c.b16 %v975, %v974
      %v986 = vpack.c.b16 %v977, %v976
      %v987 = vpack.c.b16 %v979, %v978
      %996 = vmatpush.bf16.msra.mxu0 %v987
      %997 = vmatpush.bf16.msra.mxu0 %v986
      %998 = vmatpush.bf16.msra.mxu0 %v985
      %999 = vmatpush.bf16.msra.mxu0 %v984
      %1000 = vmatpush.bf16.msra.mxu0 %v983
      %1001 = vmatpush.bf16.msra.mxu0 %v982
      %1002 = vmatpush.bf16.msra.mxu0 %v981
      %1003 = vmatpush.bf16.msra.mxu0 %v980
      %1004 = vmatmul.bf16.gmra.mxu0 %v910
      %v1005 = vpop.f32.mrf.mxu0
      %v1006 = vadd.f32 0.0, %v1005
      %v1007 = vpop.f32.mrf.mxu0
      %1008 = vdwg.mxu0
      %v1025 = vunpack.c.l.b16 %v932
      %v1026 = vunpack.c.l.b16 %v933
      %v1027 = vunpack.c.l.b16 %v934
      %v1028 = vunpack.c.l.b16 %v935
      %v1029 = vunpack.c.l.b16 %v936
      %v1030 = vunpack.c.l.b16 %v937
      %v1031 = vunpack.c.l.b16 %v938
      %v1032 = vunpack.c.l.b16 %v939
      %v1033 = vunpack.c.l.b16 %v940
      %v1034 = vunpack.c.l.b16 %v941
      %v1035 = vunpack.c.l.b16 %v942
      %v1036 = vunpack.c.l.b16 %v943
      %v1037 = vunpack.c.l.b16 %v944
      %v1038 = vunpack.c.l.b16 %v945
      %v1039 = vunpack.c.l.b16 %v946
      %v1040 = vunpack.c.l.b16 %v947
      %v1041 = vpack.c.b16 %v1026, %v1025
      %v1042 = vpack.c.b16 %v1028, %v1027
      %v1043 = vpack.c.b16 %v1030, %v1029
      %v1044 = vpack.c.b16 %v1032, %v1031
      %v1045 = vpack.c.b16 %v1034, %v1033
      %v1046 = vpack.c.b16 %v1036, %v1035
      %v1047 = vpack.c.b16 %v1038, %v1037
      %v1048 = vpack.c.b16 %v1040, %v1039
      %1057 = vmatpush.bf16.msra.mxu0 %v1048
      %1058 = vmatpush.bf16.msra.mxu0 %v1047
      %1059 = vmatpush.bf16.msra.mxu0 %v1046
      %1060 = vmatpush.bf16.msra.mxu0 %v1045
      %1061 = vmatpush.bf16.msra.mxu0 %v1044
      %1062 = vmatpush.bf16.msra.mxu0 %v1043
      %1063 = vmatpush.bf16.msra.mxu0 %v1042
      %1064 = vmatpush.bf16.msra.mxu0 %v1041
      %1065 = vmatmul.bf16.gmra.mxu0 %v911
      %v1066 = vpop.f32.mrf.mxu0
      %v1067 = vadd.f32 0.0, %v1066
      %v1068 = vpop.f32.mrf.mxu0
      %1069 = vdwg.mxu0
      %v1070 = vadd.f32 %v906, %v1006
      %v1071 = vadd.f32 %v907, %v1067
      %v1072 = vld [vmem:[#allocation3 + $0x2] sm:$0xff]
      %v1073 = vld [vmem:[#allocation3 + $0x12] sm:$0xff]
      %v1074 = vpack.c.bf16 %v1072, %v1072
      %v1075 = vpack.c.bf16 %v1073, %v1073
      %s1076 = sadd.s32 %s88, 6
      %s1077 = smul.u32 %s1076, 32
      %s1078 = smul.addr %s1077, 4
      %s1079 = scalar_lea.vmem [#allocation9], %s1078
      %v1080 = vld [vmem:[%s1079] sm:$0xf]
      %v1081 = vld [vmem:[%s1079 + $0x4] sm:$0xf]
      %v1082 = vld [vmem:[%s1079 + $0x8] sm:$0xf]
      %v1083 = vld [vmem:[%s1079 + $0xc] sm:$0xf]
      %v1084 = vld [vmem:[%s1079 + $0x10] sm:$0xf]
      %v1085 = vld [vmem:[%s1079 + $0x14] sm:$0xf]
      %v1086 = vld [vmem:[%s1079 + $0x18] sm:$0xf]
      %v1087 = vld [vmem:[%s1079 + $0x1c] sm:$0xf]
      %v1088 = vld [vmem:[%s1079 + $0x20] sm:$0xf]
      %v1089 = vld [vmem:[%s1079 + $0x24] sm:$0xf]
      %v1090 = vld [vmem:[%s1079 + $0x28] sm:$0xf]
      %v1091 = vld [vmem:[%s1079 + $0x2c] sm:$0xf]
      %v1092 = vld [vmem:[%s1079 + $0x30] sm:$0xf]
      %v1093 = vld [vmem:[%s1079 + $0x34] sm:$0xf]
      %v1094 = vld [vmem:[%s1079 + $0x38] sm:$0xf]
      %v1095 = vld [vmem:[%s1079 + $0x3c] sm:$0xf]
      %v1096 = vld [vmem:[%s1079 + $0x40] sm:$0xf]
      %v1097 = vld [vmem:[%s1079 + $0x44] sm:$0xf]
      %v1098 = vld [vmem:[%s1079 + $0x48] sm:$0xf]
      %v1099 = vld [vmem:[%s1079 + $0x4c] sm:$0xf]
      %v1100 = vld [vmem:[%s1079 + $0x50] sm:$0xf]
      %v1101 = vld [vmem:[%s1079 + $0x54] sm:$0xf]
      %v1102 = vld [vmem:[%s1079 + $0x58] sm:$0xf]
      %v1103 = vld [vmem:[%s1079 + $0x5c] sm:$0xf]
      %v1104 = vld [vmem:[%s1079 + $0x60] sm:$0xf]
      %v1105 = vld [vmem:[%s1079 + $0x64] sm:$0xf]
      %v1106 = vld [vmem:[%s1079 + $0x68] sm:$0xf]
      %v1107 = vld [vmem:[%s1079 + $0x6c] sm:$0xf]
      %v1108 = vld [vmem:[%s1079 + $0x70] sm:$0xf]
      %v1109 = vld [vmem:[%s1079 + $0x74] sm:$0xf]
      %v1110 = vld [vmem:[%s1079 + $0x78] sm:$0xf]
      %v1111 = vld [vmem:[%s1079 + $0x7c] sm:$0xf]
      %v1128 = vunpack.c.l.b16 %v1080
      %v1129 = vunpack.c.l.b16 %v1081
      %v1130 = vunpack.c.l.b16 %v1082
      %v1131 = vunpack.c.l.b16 %v1083
      %v1132 = vunpack.c.l.b16 %v1084
      %v1133 = vunpack.c.l.b16 %v1085
      %v1134 = vunpack.c.l.b16 %v1086
      %v1135 = vunpack.c.l.b16 %v1087
      %v1136 = vunpack.c.l.b16 %v1088
      %v1137 = vunpack.c.l.b16 %v1089
      %v1138 = vunpack.c.l.b16 %v1090
      %v1139 = vunpack.c.l.b16 %v1091
      %v1140 = vunpack.c.l.b16 %v1092
      %v1141 = vunpack.c.l.b16 %v1093
      %v1142 = vunpack.c.l.b16 %v1094
      %v1143 = vunpack.c.l.b16 %v1095
      %v1144 = vpack.c.b16 %v1129, %v1128
      %v1145 = vpack.c.b16 %v1131, %v1130
      %v1146 = vpack.c.b16 %v1133, %v1132
      %v1147 = vpack.c.b16 %v1135, %v1134
      %v1148 = vpack.c.b16 %v1137, %v1136
      %v1149 = vpack.c.b16 %v1139, %v1138
      %v1150 = vpack.c.b16 %v1141, %v1140
      %v1151 = vpack.c.b16 %v1143, %v1142
      %1160 = vmatpush.bf16.msra.mxu0 %v1151
      %1161 = vmatpush.bf16.msra.mxu0 %v1150
      %1162 = vmatpush.bf16.msra.mxu0 %v1149
      %1163 = vmatpush.bf16.msra.mxu0 %v1148
      %1164 = vmatpush.bf16.msra.mxu0 %v1147
      %1165 = vmatpush.bf16.msra.mxu0 %v1146
      %1166 = vmatpush.bf16.msra.mxu0 %v1145
      %1167 = vmatpush.bf16.msra.mxu0 %v1144
      %1168 = vmatmul.bf16.gmra.mxu0 %v1074
      %v1169 = vpop.f32.mrf.mxu0
      %v1170 = vadd.f32 0.0, %v1169
      %v1171 = vpop.f32.mrf.mxu0
      %1172 = vdwg.mxu0
      %v1189 = vunpack.c.l.b16 %v1096
      %v1190 = vunpack.c.l.b16 %v1097
      %v1191 = vunpack.c.l.b16 %v1098
      %v1192 = vunpack.c.l.b16 %v1099
      %v1193 = vunpack.c.l.b16 %v1100
      %v1194 = vunpack.c.l.b16 %v1101
      %v1195 = vunpack.c.l.b16 %v1102
      %v1196 = vunpack.c.l.b16 %v1103
      %v1197 = vunpack.c.l.b16 %v1104
      %v1198 = vunpack.c.l.b16 %v1105
      %v1199 = vunpack.c.l.b16 %v1106
      %v1200 = vunpack.c.l.b16 %v1107
      %v1201 = vunpack.c.l.b16 %v1108
      %v1202 = vunpack.c.l.b16 %v1109
      %v1203 = vunpack.c.l.b16 %v1110
      %v1204 = vunpack.c.l.b16 %v1111
      %v1205 = vpack.c.b16 %v1190, %v1189
      %v1206 = vpack.c.b16 %v1192, %v1191
      %v1207 = vpack.c.b16 %v1194, %v1193
      %v1208 = vpack.c.b16 %v1196, %v1195
      %v1209 = vpack.c.b16 %v1198, %v1197
      %v1210 = vpack.c.b16 %v1200, %v1199
      %v1211 = vpack.c.b16 %v1202, %v1201
      %v1212 = vpack.c.b16 %v1204, %v1203
      %1221 = vmatpush.bf16.msra.mxu0 %v1212
      %1222 = vmatpush.bf16.msra.mxu0 %v1211
      %1223 = vmatpush.bf16.msra.mxu0 %v1210
      %1224 = vmatpush.bf16.msra.mxu0 %v1209
      %1225 = vmatpush.bf16.msra.mxu0 %v1208
      %1226 = vmatpush.bf16.msra.mxu0 %v1207
      %1227 = vmatpush.bf16.msra.mxu0 %v1206
      %1228 = vmatpush.bf16.msra.mxu0 %v1205
      %1229 = vmatmul.bf16.gmra.mxu0 %v1075
      %v1230 = vpop.f32.mrf.mxu0
      %v1231 = vadd.f32 0.0, %v1230
      %v1232 = vpop.f32.mrf.mxu0
      %1233 = vdwg.mxu0
      %v1234 = vadd.f32 %v1070, %v1170
      %v1235 = vadd.f32 %v1071, %v1231
      %v1236 = vld [vmem:[#allocation3 + $0x1] sm:$0xff]
      %v1237 = vld [vmem:[#allocation3 + $0x11] sm:$0xff]
      %v1238 = vpack.c.bf16 %v1236, %v1236
      %v1239 = vpack.c.bf16 %v1237, %v1237
      %s1240 = sadd.s32 %s88, 7
      %s1241 = smul.u32 %s1240, 32
      %s1242 = smul.addr %s1241, 4
      %s1243 = scalar_lea.vmem [#allocation9], %s1242
      %v1244 = vld [vmem:[%s1243] sm:$0xf]
      %v1245 = vld [vmem:[%s1243 + $0x4] sm:$0xf]
      %v1246 = vld [vmem:[%s1243 + $0x8] sm:$0xf]
      %v1247 = vld [vmem:[%s1243 + $0xc] sm:$0xf]
      %v1248 = vld [vmem:[%s1243 + $0x10] sm:$0xf]
      %v1249 = vld [vmem:[%s1243 + $0x14] sm:$0xf]
      %v1250 = vld [vmem:[%s1243 + $0x18] sm:$0xf]
      %v1251 = vld [vmem:[%s1243 + $0x1c] sm:$0xf]
      %v1252 = vld [vmem:[%s1243 + $0x20] sm:$0xf]
      %v1253 = vld [vmem:[%s1243 + $0x24] sm:$0xf]
      %v1254 = vld [vmem:[%s1243 + $0x28] sm:$0xf]
      %v1255 = vld [vmem:[%s1243 + $0x2c] sm:$0xf]
      %v1256 = vld [vmem:[%s1243 + $0x30] sm:$0xf]
      %v1257 = vld [vmem:[%s1243 + $0x34] sm:$0xf]
      %v1258 = vld [vmem:[%s1243 + $0x38] sm:$0xf]
      %v1259 = vld [vmem:[%s1243 + $0x3c] sm:$0xf]
      %v1260 = vld [vmem:[%s1243 + $0x40] sm:$0xf]
      %v1261 = vld [vmem:[%s1243 + $0x44] sm:$0xf]
      %v1262 = vld [vmem:[%s1243 + $0x48] sm:$0xf]
      %v1263 = vld [vmem:[%s1243 + $0x4c] sm:$0xf]
      %v1264 = vld [vmem:[%s1243 + $0x50] sm:$0xf]
      %v1265 = vld [vmem:[%s1243 + $0x54] sm:$0xf]
      %v1266 = vld [vmem:[%s1243 + $0x58] sm:$0xf]
      %v1267 = vld [vmem:[%s1243 + $0x5c] sm:$0xf]
      %v1268 = vld [vmem:[%s1243 + $0x60] sm:$0xf]
      %v1269 = vld [vmem:[%s1243 + $0x64] sm:$0xf]
      %v1270 = vld [vmem:[%s1243 + $0x68] sm:$0xf]
      %v1271 = vld [vmem:[%s1243 + $0x6c] sm:$0xf]
      %v1272 = vld [vmem:[%s1243 + $0x70] sm:$0xf]
      %v1273 = vld [vmem:[%s1243 + $0x74] sm:$0xf]
      %v1274 = vld [vmem:[%s1243 + $0x78] sm:$0xf]
      %v1275 = vld [vmem:[%s1243 + $0x7c] sm:$0xf]
      %v1292 = vunpack.c.l.b16 %v1244
      %v1293 = vunpack.c.l.b16 %v1245
      %v1294 = vunpack.c.l.b16 %v1246
      %v1295 = vunpack.c.l.b16 %v1247
      %v1296 = vunpack.c.l.b16 %v1248
      %v1297 = vunpack.c.l.b16 %v1249
      %v1298 = vunpack.c.l.b16 %v1250
      %v1299 = vunpack.c.l.b16 %v1251
      %v1300 = vunpack.c.l.b16 %v1252
      %v1301 = vunpack.c.l.b16 %v1253
      %v1302 = vunpack.c.l.b16 %v1254
      %v1303 = vunpack.c.l.b16 %v1255
      %v1304 = vunpack.c.l.b16 %v1256
      %v1305 = vunpack.c.l.b16 %v1257
      %v1306 = vunpack.c.l.b16 %v1258
      %v1307 = vunpack.c.l.b16 %v1259
      %v1308 = vpack.c.b16 %v1293, %v1292
      %v1309 = vpack.c.b16 %v1295, %v1294
      %v1310 = vpack.c.b16 %v1297, %v1296
      %v1311 = vpack.c.b16 %v1299, %v1298
      %v1312 = vpack.c.b16 %v1301, %v1300
      %v1313 = vpack.c.b16 %v1303, %v1302
      %v1314 = vpack.c.b16 %v1305, %v1304
      %v1315 = vpack.c.b16 %v1307, %v1306
      %1324 = vmatpush.bf16.msra.mxu0 %v1315
      %1325 = vmatpush.bf16.msra.mxu0 %v1314
      %1326 = vmatpush.bf16.msra.mxu0 %v1313
      %1327 = vmatpush.bf16.msra.mxu0 %v1312
      %1328 = vmatpush.bf16.msra.mxu0 %v1311
      %1329 = vmatpush.bf16.msra.mxu0 %v1310
      %1330 = vmatpush.bf16.msra.mxu0 %v1309
      %1331 = vmatpush.bf16.msra.mxu0 %v1308
      %1332 = vmatmul.bf16.gmra.mxu0 %v1238
      %v1333 = vpop.f32.mrf.mxu0
      %v1334 = vadd.f32 0.0, %v1333
      %v1335 = vpop.f32.mrf.mxu0
      %1336 = vdwg.mxu0
      %v1353 = vunpack.c.l.b16 %v1260
      %v1354 = vunpack.c.l.b16 %v1261
      %v1355 = vunpack.c.l.b16 %v1262
      %v1356 = vunpack.c.l.b16 %v1263
      %v1357 = vunpack.c.l.b16 %v1264
      %v1358 = vunpack.c.l.b16 %v1265
      %v1359 = vunpack.c.l.b16 %v1266
      %v1360 = vunpack.c.l.b16 %v1267
      %v1361 = vunpack.c.l.b16 %v1268
      %v1362 = vunpack.c.l.b16 %v1269
      %v1363 = vunpack.c.l.b16 %v1270
      %v1364 = vunpack.c.l.b16 %v1271
      %v1365 = vunpack.c.l.b16 %v1272
      %v1366 = vunpack.c.l.b16 %v1273
      %v1367 = vunpack.c.l.b16 %v1274
      %v1368 = vunpack.c.l.b16 %v1275
      %v1369 = vpack.c.b16 %v1354, %v1353
      %v1370 = vpack.c.b16 %v1356, %v1355
      %v1371 = vpack.c.b16 %v1358, %v1357
      %v1372 = vpack.c.b16 %v1360, %v1359
      %v1373 = vpack.c.b16 %v1362, %v1361
      %v1374 = vpack.c.b16 %v1364, %v1363
      %v1375 = vpack.c.b16 %v1366, %v1365
      %v1376 = vpack.c.b16 %v1368, %v1367
      %1385 = vmatpush.bf16.msra.mxu0 %v1376
      %1386 = vmatpush.bf16.msra.mxu0 %v1375
      %1387 = vmatpush.bf16.msra.mxu0 %v1374
      %1388 = vmatpush.bf16.msra.mxu0 %v1373
      %1389 = vmatpush.bf16.msra.mxu0 %v1372
      %1390 = vmatpush.bf16.msra.mxu0 %v1371
      %1391 = vmatpush.bf16.msra.mxu0 %v1370
      %1392 = vmatpush.bf16.msra.mxu0 %v1369
      %1393 = vmatmul.bf16.gmra.mxu0 %v1239
      %v1394 = vpop.f32.mrf.mxu0
      %v1395 = vadd.f32 0.0, %v1394
      %v1396 = vpop.f32.mrf.mxu0
      %1397 = vdwg.mxu0
      %v1398 = vadd.f32 %v1234, %v1334
      %v1399 = vadd.f32 %v1235, %v1395
      %v1400 = vld [vmem:[#allocation2] sm:$0xff]
      %v1401 = vld [vmem:[#allocation2 + $0x8] sm:$0xff]
      %v1402 = vadd.f32 %v1400, %v1398
      %v1403 = vadd.f32 %v1401, %v1399
      %1404 = vst [vmem:[#allocation2] sm:$0xff] %v1402
      %1405 = vst [vmem:[#allocation2 + $0x8] sm:$0xff] %v1403
    $region33: #{tpu_custom_call.1} parent=1 // pred_fallthru
      _
    // Predicated region
    $region34: #{tpu_custom_call.1} parent=1 // pred_check
      %p1406 = pneg %p72
    $region35: #{tpu_custom_call.1} parent=1 // pred_check_branch
      %1408 = sbr.rel (%p1406) target = $region37
    $region36: #{tpu_custom_call.1} parent=1 // pred_region
      %v1409 = vld [vmem:[#allocation2] sm:$0xff]
      %v1410 = vld [vmem:[#allocation2 + $0x8] sm:$0xff]
      %1411 = vst [vmem:[#allocation10] sm:$0xff] %v1409
      %1412 = vst [vmem:[#allocation10 + $0x8] sm:$0xff] %v1410
    $region37: #{tpu_custom_call.1} parent=1 // pred_fallthru
      _
    // Predicated region
    $region38: #{tpu_custom_call.1} parent=1 // pred_check
      _
    $region39: #{tpu_custom_call.1} parent=1 // pred_check_branch
      %1414 = sbr.rel (0) target = $region41
    $region40: #{tpu_custom_call.1} parent=1 // pred_region
      %1416 = vsyncadd [#allocation6], 0
      %s1417 = sshll.u32 [#allocation10], 4
      %s1418 = int_to_ptr.vmem [resolvable:$true] %s1417
      %s1419 = sshll.u32 %s3, 4
      %s1420 = int_to_ptr.hbm [resolvable:$true] %s1419
      %1425 = dma.vmem_to_hbm [thread:$0]  %s1418, 256, %s1420, [#allocation6], 128, 128, 8
    $region41: #{tpu_custom_call.1} parent=1 // pred_fallthru
      _
    // Predicated region
    $region42: #{tpu_custom_call.1} parent=1 // pred_check
      _
    $region43: #{tpu_custom_call.1} parent=1 // pred_check_branch
      %1427 = sbr.rel (0) target = $region45
    $region44: #{tpu_custom_call.1} parent=1 // pred_region
      %1429 = dma.done [#allocation6], 256
    $region45: #{tpu_custom_call.1} parent=1 // pred_fallthru
      _
    %1430 = vsyncpa [#allocation5], 1
    %1431 = vsyncpa [#allocation8], 1
    %1432 = vsyncpa [#allocation6], 1

</llo_original>
